<compile_context>
chip_gen: v6e
topology: v6e:2x2x1
jax: 0.10.0
libtpu: 0.0.40
codegen_flags: <defaults>
</compile_context>

<pallas_src>
import functools
import math

import jax
import jax.numpy as jnp
from jax.experimental import pallas as pl
from jax.experimental.pallas import tpu as pltpu

HI = jax.lax.Precision.HIGHEST


# ----------------------------------------------------------------------------
# Multi-head attention sub-layer kernel (projections + attention + out-proj
# + residual + LayerNorm), one grid step per batch element.
# ----------------------------------------------------------------------------
def mha_kernel(q_ref, kv_ref, mask_ref, wq_ref, wk_ref, wv_ref, wo_ref, gb_ref,
               o_ref, ctx_ref, *, n_head):
    # q_ref:   (1, Sq, D)   queries (also the residual input)
    # kv_ref:  (1, Sk, D)   keys/values source
    # mask_ref:(1, Sq, Sk)  1.0 where masked
    # w*_ref:  (D, D)       projection weights, (in, out) layout
    # gb_ref:  (2, D)       row 0 = LN gamma, row 1 = LN beta
    # ctx_ref: (Sq, D)      VMEM scratch for the concatenated head outputs
    x = q_ref[0].astype(jnp.float32)                 # (Sq, D)
    kv = kv_ref[0].astype(jnp.float32)               # (Sk, D)
    mask = mask_ref[0]                               # (Sq, Sk)

    D = x.shape[-1]
    dk = D // n_head
    scale = 1.0 / math.sqrt(dk)

    q = jnp.dot(x, wq_ref[...], preferred_element_type=jnp.float32)
    k = jnp.dot(kv, wk_ref[...], preferred_element_type=jnp.float32)
    v = jnp.dot(kv, wv_ref[...], preferred_element_type=jnp.float32)

    for h in range(n_head):                          # static unroll over heads
        lo = h * dk
        qh = q[:, lo:lo + dk]
        kh = k[:, lo:lo + dk]
        vh = v[:, lo:lo + dk]
        s = jnp.einsum('qd,kd->qk', qh, kh,
                       preferred_element_type=jnp.float32) * scale
        s = jnp.where(mask > 0.0, jnp.float32(-1e9), s)
        m = jnp.max(s, axis=-1, keepdims=True)
        p = jnp.exp(s - m)
        p = p / jnp.sum(p, axis=-1, keepdims=True)
        ctx_ref[:, lo:lo + dk] = jnp.dot(p, vh,
                                         preferred_element_type=jnp.float32)

    out = jnp.dot(ctx_ref[...], wo_ref[...], preferred_element_type=jnp.float32)
    z = out + x                                      # residual

    gamma = gb_ref[0:1, :]
    beta = gb_ref[1:2, :]
    mean = jnp.mean(z, axis=-1, keepdims=True)
    zc = z - mean
    var = jnp.mean(zc * zc, axis=-1, keepdims=True)
    o_ref[0] = (zc * jax.lax.rsqrt(var + 1e-5) * gamma + beta).astype(o_ref.dtype)


def mha_sublayer(q_in, kv_in, mask, p, *, n_head):
    B, Sq, D = q_in.shape
    Sk = kv_in.shape[1]
    mask_f = jnp.broadcast_to(mask, (B, Sq, Sk)).astype(jnp.float32)

    kernel = functools.partial(mha_kernel, n_head=n_head)
    return pl.pallas_call(
        kernel,
        out_shape=jax.ShapeDtypeStruct((B, Sq, D), q_in.dtype),
        grid_spec=pltpu.PrefetchScalarGridSpec(
            num_scalar_prefetch=0,
            grid=(B,),
            in_specs=[
                pl.BlockSpec((1, Sq, D), lambda b: (b, 0, 0)),
                pl.BlockSpec((1, Sk, D), lambda b: (b, 0, 0)),
                pl.BlockSpec((1, Sq, Sk), lambda b: (b, 0, 0)),
                pl.BlockSpec((D, D), lambda b: (0, 0)),
                pl.BlockSpec((D, D), lambda b: (0, 0)),
                pl.BlockSpec((D, D), lambda b: (0, 0)),
                pl.BlockSpec((D, D), lambda b: (0, 0)),
                pl.BlockSpec((2, D), lambda b: (0, 0)),
            ],
            out_specs=pl.BlockSpec((1, Sq, D), lambda b: (b, 0, 0)),
            scratch_shapes=[pltpu.VMEM((Sq, D), jnp.float32)],
        ),
        compiler_params=pltpu.CompilerParams(
            dimension_semantics=("parallel",)),
    )(q_in, kv_in, mask_f, p['wq'], p['wk'], p['wv'], p['wo'], p['gb'])


# ----------------------------------------------------------------------------
# Position-wise FFN sub-layer kernel (W1 + ReLU + W2 + residual + LayerNorm),
# tiled over flattened rows.
# ----------------------------------------------------------------------------
def ffn_kernel(x_ref, w1_ref, b1_ref, w2_ref, bgb_ref, o_ref):
    # x_ref:  (tm, D)
    # w1_ref: (D, d_ff), b1_ref: (1, d_ff)
    # w2_ref: (d_ff, D)
    # bgb_ref:(3, D) rows = [b2, gamma, beta]
    x = x_ref[...].astype(jnp.float32)

    h = jnp.dot(x, w1_ref[...], preferred_element_type=jnp.float32) + b1_ref[...]
    h = jnp.maximum(h, 0.0)
    y = jnp.dot(h, w2_ref[...], preferred_element_type=jnp.float32) + bgb_ref[0:1, :]
    z = y + x                                        # residual

    mean = jnp.mean(z, axis=-1, keepdims=True)
    zc = z - mean
    var = jnp.mean(zc * zc, axis=-1, keepdims=True)
    out = zc * jax.lax.rsqrt(var + 1e-5) * bgb_ref[1:2, :] + bgb_ref[2:3, :]
    o_ref[...] = out.astype(o_ref.dtype)


def ffn_sublayer(x, p, *, tm=256):
    B, S, D = x.shape
    d_ff = p['w1'].shape[1]
    N = B * S
    tm = min(tm, N)                   # clamp for small demo shapes
    assert N % tm == 0 and tm % 8 == 0

    x2d = x.reshape(N, D)
    # For large shapes, raise vmem_limit_bytes via pltpu.CompilerParams and/or
    # tile d_ff with an "arbitrary" grid axis; at demo sizes defaults suffice.
    out = pl.pallas_call(
        ffn_kernel,
        out_shape=jax.ShapeDtypeStruct((N, D), x.dtype),
        grid_spec=pltpu.PrefetchScalarGridSpec(
            num_scalar_prefetch=0,
            grid=(N // tm,),
            in_specs=[
                pl.BlockSpec((tm, D), lambda i: (i, 0)),
                pl.BlockSpec((D, d_ff), lambda i: (0, 0)),
                pl.BlockSpec((1, d_ff), lambda i: (0, 0)),
                pl.BlockSpec((d_ff, D), lambda i: (0, 0)),
                pl.BlockSpec((3, D), lambda i: (0, 0)),
            ],
            out_specs=pl.BlockSpec((tm, D), lambda i: (i, 0)),
        ),
        compiler_params=pltpu.CompilerParams(
            dimension_semantics=("parallel",)),
    )(x2d, p['w1'], p['b1'], p['w2'], p['bgb'])
    return out.reshape(B, S, D)


# ----------------------------------------------------------------------------
# DecoderLayer forward (Pallas) and parameter init.
# ----------------------------------------------------------------------------
def decoder_layer_forward(x, tgt_mask, memory, src_mask, params, *, n_head):
    x = mha_sublayer(x, x, tgt_mask, params['self'], n_head=n_head)
    x = mha_sublayer(x, memory, src_mask, params['cross'], n_head=n_head)
    return ffn_sublayer(x, params['ffn'])


def init_decoder_layer_params(key, d_model, n_head, d_ff):
    """Weights stored once in kernel layout (in, out); LN/bias vectors
    consolidated (gb = [gamma; beta], bgb = [b2; gamma; beta])."""
    ks = jax.random.split(key, 12)

    def lin(k, din, dout):
        return jax.random.normal(k, (din, dout), jnp.float32) / math.sqrt(din)

    def mha_params(keys):
        return {
            'wq': lin(keys[0], d_model, d_model),
            'wk': lin(keys[1], d_model, d_model),
            'wv': lin(keys[2], d_model, d_model),
            'wo': lin(keys[3], d_model, d_model),
            'gb': jnp.stack([jnp.ones((d_model,), jnp.float32),
                             jnp.zeros((d_model,), jnp.float32)]),
        }

    return {
        'self': mha_params(ks[0:4]),
        'cross': mha_params(ks[4:8]),
        'ffn': {
            'w1': lin(ks[8], d_model, d_ff),
            'b1': jax.random.normal(ks[9], (1, d_ff), jnp.float32) * 0.01,
            'w2': lin(ks[10], d_ff, d_model),
            'bgb': jnp.stack([
                jax.random.normal(ks[11], (d_model,), jnp.float32) * 0.01,
                jnp.ones((d_model,), jnp.float32),
                jnp.zeros((d_model,), jnp.float32),
            ]),
        },
    }


# ----------------------------------------------------------------------------
# Pure-JAX reference (matches the PyTorch module in eval mode).
# ----------------------------------------------------------------------------
def _ln_ref(z, gamma, beta, eps=1e-5):
    mean = jnp.mean(z, axis=-1, keepdims=True)
    var = jnp.mean((z - mean) ** 2, axis=-1, keepdims=True)
    return (z - mean) * jax.lax.rsqrt(var + eps) * gamma + beta


def mha_reference(q_in, kv_in, mask, p, n_head):
    B, Sq, D = q_in.shape
    Sk = kv_in.shape[1]
    dk = D // n_head
    q = jnp.matmul(q_in, p['wq'], precision=HI).reshape(B, Sq, n_head, dk).transpose(0, 2, 1, 3)
    k = jnp.matmul(kv_in, p['wk'], precision=HI).reshape(B, Sk, n_head, dk).transpose(0, 2, 1, 3)
    v = jnp.matmul(kv_in, p['wv'], precision=HI).reshape(B, Sk, n_head, dk).transpose(0, 2, 1, 3)
    s = jnp.einsum('bhqd,bhkd->bhqk', q, k, precision=HI) / math.sqrt(dk)
    s = jnp.where(jnp.broadcast_to(mask[:, None, :, :], s.shape), -1e9, s)
    a = jax.nn.softmax(s, axis=-1)
    ctx = jnp.einsum('bhqk,bhkd->bhqd', a, v, precision=HI)
    ctx = ctx.transpose(0, 2, 1, 3).reshape(B, Sq, D)
    out = jnp.matmul(ctx, p['wo'], precision=HI)
    return _ln_ref(out + q_in, p['gb'][0], p['gb'][1])


def ffn_reference(x, p):
    h = jnp.maximum(jnp.matmul(x, p['w1'], precision=HI) + p['b1'], 0.0)
    y = jnp.matmul(h, p['w2'], precision=HI) + p['bgb'][0]
    return _ln_ref(y + x, p['bgb'][1], p['bgb'][2])


def decoder_layer_reference(x, tgt_mask, memory, src_mask, params, n_head):
    x = mha_reference(x, x, tgt_mask, params['self'], n_head)
    x = mha_reference(x, memory, src_mask, params['cross'], n_head)
    return ffn_reference(x, params['ffn'])


if __name__ == "__main__":
    # Small shapes consistent with the module: (batch, seq, d_model)
    B, Sq, Sk, D, H, D_FF = 2, 8, 8, 128, 4, 256

    key = jax.random.PRNGKey(0)
    kx, km, kp = jax.random.split(key, 3)
    x = jax.random.normal(kx, (B, Sq, D), jnp.float32)       # decoder input (embedded)
    memory = jax.random.normal(km, (B, Sk, D), jnp.float32)  # encoder memory
    params = init_decoder_layer_params(kp, D, H, D_FF)

    # Masks, built the same way as the demo (padding + subsequent).
    tgt_tokens = jnp.array([[1, 2, 3, 4, 5, 6, 0, 0],
                            [4, 5, 6, 0, 0, 0, 0, 0]], jnp.int32)
    src_tokens = jnp.array([[1, 2, 3, 4, 5, 0, 0, 0],
                            [4, 5, 0, 0, 0, 0, 0, 0]], jnp.int32)
    tgt_pad_mask = (tgt_tokens == 0)[:, None, :]                        # (B, 1, Sq)
    subsequent = (1 - jnp.tril(jnp.ones((1, Sq, Sq), jnp.int32))) > 0   # (1, Sq, Sq)
    tgt_mask = tgt_pad_mask | subsequent                                # (B, Sq, Sq)
    src_mask = (src_tokens == 0)[:, None, :]                            # (B, 1, Sk)

    out = decoder_layer_forward(x, tgt_mask, memory, src_mask, params, n_head=H)
    out = jax.block_until_ready(out)

    ref = decoder_layer_reference(x, tgt_mask, memory, src_mask, params, n_head=H)
    assert out.shape == (B, Sq, D)
    assert jnp.allclose(out, ref, atol=2e-3, rtol=2e-3), "mismatch vs reference"

    print("KERNEL_OK")
</pallas_src>

<mosaic_0001>
module attributes {stable_mosaic.version = 11 : i64} {
  func.func @mha_kernel(%arg0: i32, %arg1: memref<1x8x128xf32, #tpu.memory_space<vmem>>, %arg2: memref<1x8x128xf32, #tpu.memory_space<vmem>>, %arg3: memref<1x8x8xf32, #tpu.memory_space<vmem>>, %arg4: memref<128x128xf32, #tpu.memory_space<vmem>>, %arg5: memref<128x128xf32, #tpu.memory_space<vmem>>, %arg6: memref<128x128xf32, #tpu.memory_space<vmem>>, %arg7: memref<128x128xf32, #tpu.memory_space<vmem>>, %arg8: memref<2x128xf32, #tpu.memory_space<vmem>>, %arg9: memref<1x8x128xf32, #tpu.memory_space<vmem>>, %arg10: memref<8x128xf32, #tpu.memory_space<vmem>>) attributes {dimension_semantics = [#tpu.dimension_semantics<parallel>], iteration_bounds = array<i64: 2>, scalar_prefetch = 0 : i64, scratch_operands = 1 : i64, tpu.core_type = #tpu.core_type<tc>, window_params = [{transform_indices = @transform_0, window_bounds = array<i64: 1, 8, 128>}, {transform_indices = @transform_1, window_bounds = array<i64: 1, 8, 128>}, {transform_indices = @transform_2, window_bounds = array<i64: 1, 8, 8>}, {pipeline_mode = #tpu.pipeline_mode<synchronous>, transform_indices = @transform_3, window_bounds = array<i64: 128, 128>}, {pipeline_mode = #tpu.pipeline_mode<synchronous>, transform_indices = @transform_4, window_bounds = array<i64: 128, 128>}, {pipeline_mode = #tpu.pipeline_mode<synchronous>, transform_indices = @transform_5, window_bounds = array<i64: 128, 128>}, {pipeline_mode = #tpu.pipeline_mode<synchronous>, transform_indices = @transform_6, window_bounds = array<i64: 128, 128>}, {pipeline_mode = #tpu.pipeline_mode<synchronous>, transform_indices = @transform_7, window_bounds = array<i64: 2, 128>}, {transform_indices = @transform_8, window_bounds = array<i64: 1, 8, 128>}]} {
    %c0 = arith.constant 0 : index
    %c0_0 = arith.constant 0 : index
    %c0_1 = arith.constant 0 : index
    %0 = vector.load %arg1[%c0, %c0_0, %c0_1] : memref<1x8x128xf32, #tpu.memory_space<vmem>>, vector<1x8x128xf32>
    %1 = vector.shape_cast %0 : vector<1x8x128xf32> to vector<8x128xf32>
    %c0_2 = arith.constant 0 : index
    %c0_3 = arith.constant 0 : index
    %c0_4 = arith.constant 0 : index
    %2 = vector.load %arg2[%c0_2, %c0_3, %c0_4] : memref<1x8x128xf32, #tpu.memory_space<vmem>>, vector<1x8x128xf32>
    %3 = vector.shape_cast %2 : vector<1x8x128xf32> to vector<8x128xf32>
    %c0_5 = arith.constant 0 : index
    %c0_6 = arith.constant 0 : index
    %c0_7 = arith.constant 0 : index
    %4 = vector.load %arg3[%c0_5, %c0_6, %c0_7] : memref<1x8x8xf32, #tpu.memory_space<vmem>>, vector<1x8x8xf32>
    %5 = vector.shape_cast %4 : vector<1x8x8xf32> to vector<8x8xf32>
    %c0_8 = arith.constant 0 : index
    %c0_9 = arith.constant 0 : index
    %6 = vector.load %arg4[%c0_8, %c0_9] : memref<128x128xf32, #tpu.memory_space<vmem>>, vector<128x128xf32>
    %cst = arith.constant dense<0.000000e+00> : vector<8x128xf32>
    %7 = tpu.matmul %1, %6, %cst {dimension_numbers = #tpu.dot_dimension_numbers<[1], [0], [0], [1], [0, 0, 1, 1], [], []>} : vector<8x128xf32>, vector<128x128xf32>, vector<8x128xf32> -> vector<8x128xf32>
    %c0_10 = arith.constant 0 : index
    %c0_11 = arith.constant 0 : index
    %8 = vector.load %arg5[%c0_10, %c0_11] : memref<128x128xf32, #tpu.memory_space<vmem>>, vector<128x128xf32>
    %cst_12 = arith.constant dense<0.000000e+00> : vector<8x128xf32>
    %9 = tpu.matmul %3, %8, %cst_12 {dimension_numbers = #tpu.dot_dimension_numbers<[1], [0], [0], [1], [0, 0, 1, 1], [], []>} : vector<8x128xf32>, vector<128x128xf32>, vector<8x128xf32> -> vector<8x128xf32>
    %c0_13 = arith.constant 0 : index
    %c0_14 = arith.constant 0 : index
    %10 = vector.load %arg6[%c0_13, %c0_14] : memref<128x128xf32, #tpu.memory_space<vmem>>, vector<128x128xf32>
    %cst_15 = arith.constant dense<0.000000e+00> : vector<8x128xf32>
    %11 = tpu.matmul %3, %10, %cst_15 {dimension_numbers = #tpu.dot_dimension_numbers<[1], [0], [0], [1], [0, 0, 1, 1], [], []>} : vector<8x128xf32>, vector<128x128xf32>, vector<8x128xf32> -> vector<8x128xf32>
    %12 = vector.extract_strided_slice %7 {offsets = [0, 0], sizes = [8, 32], strides = [1, 1]} : vector<8x128xf32> to vector<8x32xf32>
    %13 = vector.extract_strided_slice %9 {offsets = [0, 0], sizes = [8, 32], strides = [1, 1]} : vector<8x128xf32> to vector<8x32xf32>
    %14 = vector.extract_strided_slice %11 {offsets = [0, 0], sizes = [8, 32], strides = [1, 1]} : vector<8x128xf32> to vector<8x32xf32>
    "tpu.trace_start"() <{level = 10 : i32, message = "qd,kd->qk"}> : () -> ()
    %cst_16 = arith.constant dense<0.000000e+00> : vector<8x8xf32>
    %15 = tpu.matmul %12, %13, %cst_16 {dimension_numbers = #tpu.dot_dimension_numbers<[1], [1], [0], [0], [0, 0, 1, 0], [], []>} : vector<8x32xf32>, vector<8x32xf32>, vector<8x8xf32> -> vector<8x8xf32>
    "tpu.trace_stop"() : () -> ()
    %cst_17 = arith.constant 0.176776692 : f32
    %16 = vector.broadcast %cst_17 : f32 to vector<8x8xf32>
    %17 = arith.mulf %15, %16 : vector<8x8xf32>
    %cst_18 = arith.constant 0.000000e+00 : f32
    %18 = vector.broadcast %cst_18 : f32 to vector<8x8xf32>
    %19 = arith.cmpf ogt, %5, %18 : vector<8x8xf32>
    %cst_19 = arith.constant -1.000000e+09 : f32
    %20 = vector.broadcast %cst_19 : f32 to vector<8x8xf32>
    %21 = arith.select %19, %20, %17 : vector<8x8xi1>, vector<8x8xf32>
    %cst_20 = arith.constant dense<0xFF800000> : vector<8xf32>
    %22 = vector.multi_reduction <maximumf>, %21, %cst_20 [1] : vector<8x8xf32> to vector<8xf32>
    %23 = vector.shape_cast %22 : vector<8xf32> to vector<8x1xf32>
    %24 = vector.broadcast %23 : vector<8x1xf32> to vector<8x8xf32>
    %25 = arith.subf %21, %24 : vector<8x8xf32>
    %26 = math.exp %25 : vector<8x8xf32>
    %cst_21 = arith.constant dense<0.000000e+00> : vector<8xf32>
    %27 = vector.multi_reduction <add>, %26, %cst_21 [1] : vector<8x8xf32> to vector<8xf32>
    %28 = vector.shape_cast %27 : vector<8xf32> to vector<8x1xf32>
    %29 = vector.broadcast %28 : vector<8x1xf32> to vector<8x8xf32>
    %30 = arith.divf %26, %29 : vector<8x8xf32>
    %cst_22 = arith.constant dense<0.000000e+00> : vector<8x32xf32>
    %31 = tpu.matmul %30, %14, %cst_22 {dimension_numbers = #tpu.dot_dimension_numbers<[1], [0], [0], [1], [0, 0, 1, 1], [], []>} : vector<8x8xf32>, vector<8x32xf32>, vector<8x32xf32> -> vector<8x32xf32>
    %c0_23 = arith.constant 0 : index
    %c0_24 = arith.constant 0 : index
    %32 = vector.load %arg10[%c0_23, %c0_24] : memref<8x128xf32, #tpu.memory_space<vmem>>, vector<8x32xf32>
    tpu.vector_store %arg10[%c0_23, %c0_24], %31 {strides = array<i32>} : memref<8x128xf32, #tpu.memory_space<vmem>>, vector<8x32xf32>,
    %33 = vector.extract_strided_slice %7 {offsets = [0, 32], sizes = [8, 32], strides = [1, 1]} : vector<8x128xf32> to vector<8x32xf32>
    %34 = vector.extract_strided_slice %9 {offsets = [0, 32], sizes = [8, 32], strides = [1, 1]} : vector<8x128xf32> to vector<8x32xf32>
    %35 = vector.extract_strided_slice %11 {offsets = [0, 32], sizes = [8, 32], strides = [1, 1]} : vector<8x128xf32> to vector<8x32xf32>
    "tpu.trace_start"() <{level = 10 : i32, message = "qd,kd->qk"}> : () -> ()
    %cst_25 = arith.constant dense<0.000000e+00> : vector<8x8xf32>
    %36 = tpu.matmul %33, %34, %cst_25 {dimension_numbers = #tpu.dot_dimension_numbers<[1], [1], [0], [0], [0, 0, 1, 0], [], []>} : vector<8x32xf32>, vector<8x32xf32>, vector<8x8xf32> -> vector<8x8xf32>
    "tpu.trace_stop"() : () -> ()
    %cst_26 = arith.constant 0.176776692 : f32
    %37 = vector.broadcast %cst_26 : f32 to vector<8x8xf32>
    %38 = arith.mulf %36, %37 : vector<8x8xf32>
    %cst_27 = arith.constant 0.000000e+00 : f32
    %39 = vector.broadcast %cst_27 : f32 to vector<8x8xf32>
    %40 = arith.cmpf ogt, %5, %39 : vector<8x8xf32>
    %cst_28 = arith.constant -1.000000e+09 : f32
    %41 = vector.broadcast %cst_28 : f32 to vector<8x8xf32>
    %42 = arith.select %40, %41, %38 : vector<8x8xi1>, vector<8x8xf32>
    %cst_29 = arith.constant dense<0xFF800000> : vector<8xf32>
    %43 = vector.multi_reduction <maximumf>, %42, %cst_29 [1] : vector<8x8xf32> to vector<8xf32>
    %44 = vector.shape_cast %43 : vector<8xf32> to vector<8x1xf32>
    %45 = vector.broadcast %44 : vector<8x1xf32> to vector<8x8xf32>
    %46 = arith.subf %42, %45 : vector<8x8xf32>
    %47 = math.exp %46 : vector<8x8xf32>
    %cst_30 = arith.constant dense<0.000000e+00> : vector<8xf32>
    %48 = vector.multi_reduction <add>, %47, %cst_30 [1] : vector<8x8xf32> to vector<8xf32>
    %49 = vector.shape_cast %48 : vector<8xf32> to vector<8x1xf32>
    %50 = vector.broadcast %49 : vector<8x1xf32> to vector<8x8xf32>
    %51 = arith.divf %47, %50 : vector<8x8xf32>
    %cst_31 = arith.constant dense<0.000000e+00> : vector<8x32xf32>
    %52 = tpu.matmul %51, %35, %cst_31 {dimension_numbers = #tpu.dot_dimension_numbers<[1], [0], [0], [1], [0, 0, 1, 1], [], []>} : vector<8x8xf32>, vector<8x32xf32>, vector<8x32xf32> -> vector<8x32xf32>
    %c0_32 = arith.constant 0 : index
    %c32 = arith.constant 32 : index
    %53 = vector.load %arg10[%c0_32, %c32] : memref<8x128xf32, #tpu.memory_space<vmem>>, vector<8x32xf32>
    tpu.vector_store %arg10[%c0_32, %c32], %52 {strides = array<i32>} : memref<8x128xf32, #tpu.memory_space<vmem>>, vector<8x32xf32>,
    %54 = vector.extract_strided_slice %7 {offsets = [0, 64], sizes = [8, 32], strides = [1, 1]} : vector<8x128xf32> to vector<8x32xf32>
    %55 = vector.extract_strided_slice %9 {offsets = [0, 64], sizes = [8, 32], strides = [1, 1]} : vector<8x128xf32> to vector<8x32xf32>
    %56 = vector.extract_strided_slice %11 {offsets = [0, 64], sizes = [8, 32], strides = [1, 1]} : vector<8x128xf32> to vector<8x32xf32>
    "tpu.trace_start"() <{level = 10 : i32, message = "qd,kd->qk"}> : () -> ()
    %cst_33 = arith.constant dense<0.000000e+00> : vector<8x8xf32>
    %57 = tpu.matmul %54, %55, %cst_33 {dimension_numbers = #tpu.dot_dimension_numbers<[1], [1], [0], [0], [0, 0, 1, 0], [], []>} : vector<8x32xf32>, vector<8x32xf32>, vector<8x8xf32> -> vector<8x8xf32>
    "tpu.trace_stop"() : () -> ()
    %cst_34 = arith.constant 0.176776692 : f32
    %58 = vector.broadcast %cst_34 : f32 to vector<8x8xf32>
    %59 = arith.mulf %57, %58 : vector<8x8xf32>
    %cst_35 = arith.constant 0.000000e+00 : f32
    %60 = vector.broadcast %cst_35 : f32 to vector<8x8xf32>
    %61 = arith.cmpf ogt, %5, %60 : vector<8x8xf32>
    %cst_36 = arith.constant -1.000000e+09 : f32
    %62 = vector.broadcast %cst_36 : f32 to vector<8x8xf32>
    %63 = arith.select %61, %62, %59 : vector<8x8xi1>, vector<8x8xf32>
    %cst_37 = arith.constant dense<0xFF800000> : vector<8xf32>
    %64 = vector.multi_reduction <maximumf>, %63, %cst_37 [1] : vector<8x8xf32> to vector<8xf32>
    %65 = vector.shape_cast %64 : vector<8xf32> to vector<8x1xf32>
    %66 = vector.broadcast %65 : vector<8x1xf32> to vector<8x8xf32>
    %67 = arith.subf %63, %66 : vector<8x8xf32>
    %68 = math.exp %67 : vector<8x8xf32>
    %cst_38 = arith.constant dense<0.000000e+00> : vector<8xf32>
    %69 = vector.multi_reduction <add>, %68, %cst_38 [1] : vector<8x8xf32> to vector<8xf32>
    %70 = vector.shape_cast %69 : vector<8xf32> to vector<8x1xf32>
    %71 = vector.broadcast %70 : vector<8x1xf32> to vector<8x8xf32>
    %72 = arith.divf %68, %71 : vector<8x8xf32>
    %cst_39 = arith.constant dense<0.000000e+00> : vector<8x32xf32>
    %73 = tpu.matmul %72, %56, %cst_39 {dimension_numbers = #tpu.dot_dimension_numbers<[1], [0], [0], [1], [0, 0, 1, 1], [], []>} : vector<8x8xf32>, vector<8x32xf32>, vector<8x32xf32> -> vector<8x32xf32>
    %c0_40 = arith.constant 0 : index
    %c64 = arith.constant 64 : index
    %74 = vector.load %arg10[%c0_40, %c64] : memref<8x128xf32, #tpu.memory_space<vmem>>, vector<8x32xf32>
    tpu.vector_store %arg10[%c0_40, %c64], %73 {strides = array<i32>} : memref<8x128xf32, #tpu.memory_space<vmem>>, vector<8x32xf32>,
    %75 = vector.extract_strided_slice %7 {offsets = [0, 96], sizes = [8, 32], strides = [1, 1]} : vector<8x128xf32> to vector<8x32xf32>
    %76 = vector.extract_strided_slice %9 {offsets = [0, 96], sizes = [8, 32], strides = [1, 1]} : vector<8x128xf32> to vector<8x32xf32>
    %77 = vector.extract_strided_slice %11 {offsets = [0, 96], sizes = [8, 32], strides = [1, 1]} : vector<8x128xf32> to vector<8x32xf32>
    "tpu.trace_start"() <{level = 10 : i32, message = "qd,kd->qk"}> : () -> ()
    %cst_41 = arith.constant dense<0.000000e+00> : vector<8x8xf32>
    %78 = tpu.matmul %75, %76, %cst_41 {dimension_numbers = #tpu.dot_dimension_numbers<[1], [1], [0], [0], [0, 0, 1, 0], [], []>} : vector<8x32xf32>, vector<8x32xf32>, vector<8x8xf32> -> vector<8x8xf32>
    "tpu.trace_stop"() : () -> ()
    %cst_42 = arith.constant 0.176776692 : f32
    %79 = vector.broadcast %cst_42 : f32 to vector<8x8xf32>
    %80 = arith.mulf %78, %79 : vector<8x8xf32>
    %cst_43 = arith.constant 0.000000e+00 : f32
    %81 = vector.broadcast %cst_43 : f32 to vector<8x8xf32>
    %82 = arith.cmpf ogt, %5, %81 : vector<8x8xf32>
    %cst_44 = arith.constant -1.000000e+09 : f32
    %83 = vector.broadcast %cst_44 : f32 to vector<8x8xf32>
    %84 = arith.select %82, %83, %80 : vector<8x8xi1>, vector<8x8xf32>
    %cst_45 = arith.constant dense<0xFF800000> : vector<8xf32>
    %85 = vector.multi_reduction <maximumf>, %84, %cst_45 [1] : vector<8x8xf32> to vector<8xf32>
    %86 = vector.shape_cast %85 : vector<8xf32> to vector<8x1xf32>
    %87 = vector.broadcast %86 : vector<8x1xf32> to vector<8x8xf32>
    %88 = arith.subf %84, %87 : vector<8x8xf32>
    %89 = math.exp %88 : vector<8x8xf32>
    %cst_46 = arith.constant dense<0.000000e+00> : vector<8xf32>
    %90 = vector.multi_reduction <add>, %89, %cst_46 [1] : vector<8x8xf32> to vector<8xf32>
    %91 = vector.shape_cast %90 : vector<8xf32> to vector<8x1xf32>
    %92 = vector.broadcast %91 : vector<8x1xf32> to vector<8x8xf32>
    %93 = arith.divf %89, %92 : vector<8x8xf32>
    %cst_47 = arith.constant dense<0.000000e+00> : vector<8x32xf32>
    %94 = tpu.matmul %93, %77, %cst_47 {dimension_numbers = #tpu.dot_dimension_numbers<[1], [0], [0], [1], [0, 0, 1, 1], [], []>} : vector<8x8xf32>, vector<8x32xf32>, vector<8x32xf32> -> vector<8x32xf32>
    %c0_48 = arith.constant 0 : index
    %c96 = arith.constant 96 : index
    %95 = vector.load %arg10[%c0_48, %c96] : memref<8x128xf32, #tpu.memory_space<vmem>>, vector<8x32xf32>
    tpu.vector_store %arg10[%c0_48, %c96], %94 {strides = array<i32>} : memref<8x128xf32, #tpu.memory_space<vmem>>, vector<8x32xf32>,
    %c0_49 = arith.constant 0 : index
    %c0_50 = arith.constant 0 : index
    %96 = vector.load %arg10[%c0_49, %c0_50] : memref<8x128xf32, #tpu.memory_space<vmem>>, vector<8x128xf32>
    %c0_51 = arith.constant 0 : index
    %c0_52 = arith.constant 0 : index
    %97 = vector.load %arg7[%c0_51, %c0_52] : memref<128x128xf32, #tpu.memory_space<vmem>>, vector<128x128xf32>
    %cst_53 = arith.constant dense<0.000000e+00> : vector<8x128xf32>
    %98 = tpu.matmul %96, %97, %cst_53 {dimension_numbers = #tpu.dot_dimension_numbers<[1], [0], [0], [1], [0, 0, 1, 1], [], []>} : vector<8x128xf32>, vector<128x128xf32>, vector<8x128xf32> -> vector<8x128xf32>
    %99 = arith.addf %98, %1 : vector<8x128xf32>
    %c0_54 = arith.constant 0 : index
    %c0_55 = arith.constant 0 : index
    %100 = vector.load %arg8[%c0_54, %c0_55] : memref<2x128xf32, #tpu.memory_space<vmem>>, vector<1x128xf32>
    %c1 = arith.constant 1 : index
    %c0_56 = arith.constant 0 : index
    %101 = vector.load %arg8[%c1, %c0_56] : memref<2x128xf32, #tpu.memory_space<vmem>>, vector<1x128xf32>
    %cst_57 = arith.constant dense<0.000000e+00> : vector<8xf32>
    %102 = vector.multi_reduction <add>, %99, %cst_57 [1] : vector<8x128xf32> to vector<8xf32>
    %103 = vector.shape_cast %102 : vector<8xf32> to vector<8x1xf32>
    %cst_58 = arith.constant 1.280000e+02 : f32
    %104 = vector.broadcast %cst_58 : f32 to vector<8x1xf32>
    %105 = arith.divf %103, %104 : vector<8x1xf32>
    %106 = vector.broadcast %105 : vector<8x1xf32> to vector<8x128xf32>
    %107 = arith.subf %99, %106 : vector<8x128xf32>
    %108 = arith.mulf %107, %107 : vector<8x128xf32>
    %cst_59 = arith.constant dense<0.000000e+00> : vector<8xf32>
    %109 = vector.multi_reduction <add>, %108, %cst_59 [1] : vector<8x128xf32> to vector<8xf32>
    %110 = vector.shape_cast %109 : vector<8xf32> to vector<8x1xf32>
    %cst_60 = arith.constant 1.280000e+02 : f32
    %111 = vector.broadcast %cst_60 : f32 to vector<8x1xf32>
    %112 = arith.divf %110, %111 : vector<8x1xf32>
    %cst_61 = arith.constant 9.99999974E-6 : f32
    %113 = vector.broadcast %cst_61 : f32 to vector<8x1xf32>
    %114 = arith.addf %112, %113 : vector<8x1xf32>
    %115 = math.rsqrt %114 : vector<8x1xf32>
    %116 = vector.broadcast %115 : vector<8x1xf32> to vector<8x128xf32>
    %117 = arith.mulf %107, %116 : vector<8x128xf32>
    %118 = vector.broadcast %100 : vector<1x128xf32> to vector<8x128xf32>
    %119 = arith.mulf %117, %118 : vector<8x128xf32>
    %120 = vector.broadcast %101 : vector<1x128xf32> to vector<8x128xf32>
    %121 = arith.addf %119, %120 : vector<8x128xf32>
    %c0_62 = arith.constant 0 : index
    %c0_63 = arith.constant 0 : index
    %c0_64 = arith.constant 0 : index
    %122 = vector.load %arg9[%c0_62, %c0_63, %c0_64] : memref<1x8x128xf32, #tpu.memory_space<vmem>>, vector<1x8x128xf32>
    %123 = vector.shape_cast %122 : vector<1x8x128xf32> to vector<8x128xf32>
    %124 = vector.shape_cast %121 : vector<8x128xf32> to vector<1x8x128xf32>
    tpu.vector_store %arg9[%c0_62, %c0_63, %c0_64], %124 {strides = array<i32>} : memref<1x8x128xf32, #tpu.memory_space<vmem>>, vector<1x8x128xf32>,
    return
  }
  func.func @transform_0(%arg0: i32) -> (i32, i32, i32) {
    %c0_i32 = arith.constant 0 : i32
    %c0_i32_0 = arith.constant 0 : i32
    %c0_i32_1 = arith.constant 0 : i32
    return %arg0, %c0_i32, %c0_i32_0 : i32, i32, i32
  }
  func.func @transform_1(%arg0: i32) -> (i32, i32, i32) {
    %c0_i32 = arith.constant 0 : i32
    %c0_i32_0 = arith.constant 0 : i32
    %c0_i32_1 = arith.constant 0 : i32
    return %arg0, %c0_i32, %c0_i32_0 : i32, i32, i32
  }
  func.func @transform_2(%arg0: i32) -> (i32, i32, i32) {
    %c0_i32 = arith.constant 0 : i32
    %c0_i32_0 = arith.constant 0 : i32
    %c0_i32_1 = arith.constant 0 : i32
    return %arg0, %c0_i32, %c0_i32_0 : i32, i32, i32
  }
  func.func @transform_3(%arg0: i32) -> (i32, i32) {
    %c0_i32 = arith.constant 0 : i32
    %c0_i32_0 = arith.constant 0 : i32
    %c0_i32_1 = arith.constant 0 : i32
    return %c0_i32, %c0_i32_0 : i32, i32
  }
  func.func @transform_4(%arg0: i32) -> (i32, i32) {
    %c0_i32 = arith.constant 0 : i32
    %c0_i32_0 = arith.constant 0 : i32
    %c0_i32_1 = arith.constant 0 : i32
    return %c0_i32, %c0_i32_0 : i32, i32
  }
  func.func @transform_5(%arg0: i32) -> (i32, i32) {
    %c0_i32 = arith.constant 0 : i32
    %c0_i32_0 = arith.constant 0 : i32
    %c0_i32_1 = arith.constant 0 : i32
    return %c0_i32, %c0_i32_0 : i32, i32
  }
  func.func @transform_6(%arg0: i32) -> (i32, i32) {
    %c0_i32 = arith.constant 0 : i32
    %c0_i32_0 = arith.constant 0 : i32
    %c0_i32_1 = arith.constant 0 : i32
    return %c0_i32, %c0_i32_0 : i32, i32
  }
  func.func @transform_7(%arg0: i32) -> (i32, i32) {
    %c0_i32 = arith.constant 0 : i32
    %c0_i32_0 = arith.constant 0 : i32
    %c0_i32_1 = arith.constant 0 : i32
    return %c0_i32, %c0_i32_0 : i32, i32
  }
  func.func @transform_8(%arg0: i32) -> (i32, i32, i32) {
    %c0_i32 = arith.constant 0 : i32
    %c0_i32_0 = arith.constant 0 : i32
    %c0_i32_1 = arith.constant 0 : i32
    return %arg0, %c0_i32, %c0_i32_0 : i32, i32, i32
  }
}

</mosaic_0001>

<llo_original>
// kernel: tpu_custom_call.1
$region0: #{tpu_custom_call.1}
  #allocation0 [shape = 'u32[]', space=smem, size = 0x4, offset = 0x4, fixed_abs, tag = 'smem constant byte address 0x4 - core index']
  #allocation1 [shape = 'u32[144,128]{1,0:T(1,128)}', space=vmem, size = 0x12000, scoped, tag = 'internal scratch']
  #allocation2 [shape = 'f32[8,128]{1,0:T(8,128)}', space=vmem, size = 0x1000, scoped, tag = 'scratch operand']
  %s0 = inlined_call_operand.hbm [shape: f32[2,8,128], index: 0, kind: input, shape index: {}]
  %s1 = inlined_call_operand.hbm [shape: f32[2,8,128], index: 1, kind: input, shape index: {}]
  %s2 = inlined_call_operand.hbm [shape: f32[2,8,8], index: 2, kind: input, shape index: {}]
  %s3 = inlined_call_operand.hbm [shape: f32[128,128], index: 3, kind: input, shape index: {}]
  %s4 = inlined_call_operand.hbm [shape: f32[128,128], index: 4, kind: input, shape index: {}]
  %s5 = inlined_call_operand.hbm [shape: f32[128,128], index: 5, kind: input, shape index: {}]
  %s6 = inlined_call_operand.hbm [shape: f32[128,128], index: 6, kind: input, shape index: {}]
  %s7 = inlined_call_operand.vmem [shape: f32[2,128], index: 7, kind: input, shape index: {}]
  %s8 = inlined_call_operand.hbm [shape: f32[2,8,128], index: 8, kind: output, shape index: {}]
  %s9 = sld [smem:[#allocation0]]
  $region93: #{tpu_custom_call.1} parent=0
    _
  %s11 = ssub.s32 1, %s9
  %s12 = scalar_select 0, %s11, %s9
  $region1: #{tpu_custom_call.1} parent=0
    #allocation3 [shape = 'u8[8192]{0}', space=vmem, size = 0x2000, scoped, tag = 'input window, operand 0']
    #allocation4 [shape = 's32[2]{0}', space=sflag, size = 0x8, scoped, tag = 'scoped memory for tpu_custom_call.1']
    #allocation5 [shape = 's32[2]{0}', space=sflag, size = 0x8, scoped, tag = 'scoped memory for tpu_custom_call.1']
    #allocation6 [shape = 'u8[8192]{0}', space=vmem, size = 0x2000, scoped, tag = 'input window, operand 1']
    #allocation7 [shape = 's32[2]{0}', space=sflag, size = 0x8, scoped, tag = 'scoped memory for tpu_custom_call.1']
    #allocation8 [shape = 'u8[8192]{0}', space=vmem, size = 0x2000, scoped, tag = 'input window, operand 2']
    #allocation9 [shape = 'u8[65536]{0}', space=vmem, size = 0x10000, scoped, tag = 'input window, operand 3, single buffered']
    #allocation10 [shape = 's32[1]{0}', space=sflag, size = 0x4, scoped, tag = 'scoped memory for tpu_custom_call.1']
    #allocation11 [shape = 'u8[65536]{0}', space=vmem, size = 0x10000, scoped, tag = 'input window, operand 4, single buffered']
    #allocation12 [shape = 'u8[65536]{0}', space=vmem, size = 0x10000, scoped, tag = 'input window, operand 5, single buffered']
    #allocation13 [shape = 's32[1]{0}', space=sflag, size = 0x4, scoped, tag = 'scoped memory for tpu_custom_call.1']
    #allocation14 [shape = 'u8[65536]{0}', space=vmem, size = 0x10000, scoped, tag = 'input window, operand 6, single buffered']
    #allocation15 [shape = 'u8[8192]{0}', space=vmem, size = 0x2000, scoped, tag = 'output window, operand 0']
    %13 = vsyncpa [#allocation4], 0
    %s14 = scalar_lea.sflag [#allocation4], 1
    %15 = vsyncpa %s14, 0
    %16 = vsyncpa [#allocation7], 0
    %s17 = scalar_lea.sflag [#allocation7], 1
    %18 = vsyncpa %s17, 0
    %19 = vsyncpa [#allocation10], 0
    %20 = vsyncpa [#allocation13], 0
    %21 = vsyncpa [#allocation5], 0
    %s22 = scalar_lea.sflag [#allocation5], 1
    %23 = vsyncpa %s22, 0
    loop: start=0, step=1, limit=4
    $region2: #{tpu_custom_call.1} parent=1 // loop_pre_header
      _
    $region3: #{tpu_custom_call.1} parent=1 // loop_header
      %s25 = sphi 0, %s29
      %p26 = scmp.ge.s32.totalorder %s25, 4
      %s35 = sphi 0, %s37
      %s38 = sphi 0, %s35
      %s39 = sphi 0, %s38
      %s55 = sphi 0, %s39
      %s61 = sphi 0, %s63
      %s64 = sphi 0, %s61
      %s65 = sphi 0, %s64
      %s81 = sphi 0, %s65
      %s87 = sphi 0, %s89
      %s90 = sphi 0, %s87
      %s91 = sphi 0, %s90
      %s107 = sphi 0, %s91
      %s111 = sphi 0, %s111
      %s113 = sphi 0, %s111
      %s114 = sphi 0, %s113
      %s128 = sphi 0, %s114
      %s132 = sphi 0, %s132
      %s134 = sphi 0, %s132
      %s135 = sphi 0, %s134
      %s149 = sphi 0, %s135
      %s153 = sphi 0, %s153
      %s155 = sphi 0, %s153
      %s156 = sphi 0, %s155
      %s170 = sphi 0, %s156
      %s174 = sphi 0, %s174
      %s176 = sphi 0, %s174
      %s177 = sphi 0, %s176
      %s191 = sphi 0, %s177
      %s195 = sphi 0, %s195
      %s197 = sphi 0, %s195
      %s198 = sphi 0, %s197
      %s212 = sphi 0, %s198
      %s218 = sphi 0, %s220
      %s221 = sphi 0, %s218
      %s222 = sphi 0, %s221
      %s238 = sphi 0, %s222
    $region4: #{tpu_custom_call.1} parent=1 // loop_header_branch
      %28 = sbr.rel (%p26) target = $region8
    $region5: #{tpu_custom_call.1} parent=1 // loop_body
      %s30 = ssub.s32 %s25, 1
      %s31 = ssub.s32 %s25, 2
      %s32 = sadd.s32 %s25, 1
      %s33 = ssub.s32 %s25, %s32
      %p34 = scmp.eq.s32.totalorder %s33, 0
      %s36 = sadd.s32 %s35, 1
      %s37 = scalar_select %p34, %s35, %s36
      %p40 = pneg %p34
      %p41 = scmp.eq.s32.totalorder %s25, 1
      %p42 = por %p40, %p41
      %p43 = scmp.ne.s32.totalorder %s35, %s38
      %p44 = scmp.eq.s32.totalorder %s25, 0
      %p45 = por %p43, %p44
      %p46 = scmp.ne.s32.totalorder %s35, %s38
      %p47 = scmp.eq.s32.totalorder %s30, 1
      %p48 = por %p46, %p47
      %p49 = scmp.ne.s32.totalorder %s38, %s39
      %p50 = scmp.eq.s32.totalorder %s30, 0
      %p51 = por %p49, %p50
      %p52 = scmp.ne.s32.totalorder %s38, %s39
      %p53 = scmp.eq.s32.totalorder %s31, 1
      %p54 = por %p52, %p53
      %p56 = scmp.ne.s32.totalorder %s39, %s55
      %p57 = scmp.eq.s32.totalorder %s31, 0
      %p58 = por %p56, %p57
      %s59 = ssub.s32 %s25, %s32
      %p60 = scmp.eq.s32.totalorder %s59, 0
      %s62 = sadd.s32 %s61, 1
      %s63 = scalar_select %p60, %s61, %s62
      %p66 = pneg %p60
      %p67 = scmp.eq.s32.totalorder %s25, 1
      %p68 = por %p66, %p67
      %p69 = scmp.ne.s32.totalorder %s61, %s64
      %p70 = scmp.eq.s32.totalorder %s25, 0
      %p71 = por %p69, %p70
      %p72 = scmp.ne.s32.totalorder %s61, %s64
      %p73 = scmp.eq.s32.totalorder %s30, 1
      %p74 = por %p72, %p73
      %p75 = scmp.ne.s32.totalorder %s64, %s65
      %p76 = scmp.eq.s32.totalorder %s30, 0
      %p77 = por %p75, %p76
      %p78 = scmp.ne.s32.totalorder %s64, %s65
      %p79 = scmp.eq.s32.totalorder %s31, 1
      %p80 = por %p78, %p79
      %p82 = scmp.ne.s32.totalorder %s65, %s81
      %p83 = scmp.eq.s32.totalorder %s31, 0
      %p84 = por %p82, %p83
      %s85 = ssub.s32 %s25, %s32
      %p86 = scmp.eq.s32.totalorder %s85, 0
      %s88 = sadd.s32 %s87, 1
      %s89 = scalar_select %p86, %s87, %s88
      %p92 = pneg %p86
      %p93 = scmp.eq.s32.totalorder %s25, 1
      %p94 = por %p92, %p93
      %p95 = scmp.ne.s32.totalorder %s87, %s90
      %p96 = scmp.eq.s32.totalorder %s25, 0
      %p97 = por %p95, %p96
      %p98 = scmp.ne.s32.totalorder %s87, %s90
      %p99 = scmp.eq.s32.totalorder %s30, 1
      %p100 = por %p98, %p99
      %p101 = scmp.ne.s32.totalorder %s90, %s91
      %p102 = scmp.eq.s32.totalorder %s30, 0
      %p103 = por %p101, %p102
      %p104 = scmp.ne.s32.totalorder %s90, %s91
      %p105 = scmp.eq.s32.totalorder %s31, 1
      %p106 = por %p104, %p105
      %p108 = scmp.ne.s32.totalorder %s91, %s107
      %p109 = scmp.eq.s32.totalorder %s31, 0
      %p110 = por %p108, %p109
      %s112 = sadd.s32 %s111, 1
      %p115 = scmp.eq.s32.totalorder %s25, 1
      %p116 = scmp.ne.s32.totalorder %s111, %s113
      %p117 = scmp.eq.s32.totalorder %s25, 0
      %p118 = por %p116, %p117
      %p119 = scmp.ne.s32.totalorder %s111, %s113
      %p120 = scmp.eq.s32.totalorder %s30, 1
      %p121 = por %p119, %p120
      %p122 = scmp.ne.s32.totalorder %s113, %s114
      %p123 = scmp.eq.s32.totalorder %s30, 0
      %p124 = por %p122, %p123
      %p125 = scmp.ne.s32.totalorder %s113, %s114
      %p126 = scmp.eq.s32.totalorder %s31, 1
      %p127 = por %p125, %p126
      %p129 = scmp.ne.s32.totalorder %s114, %s128
      %p130 = scmp.eq.s32.totalorder %s31, 0
      %p131 = por %p129, %p130
      %s133 = sadd.s32 %s132, 1
      %p136 = scmp.eq.s32.totalorder %s25, 1
      %p137 = scmp.ne.s32.totalorder %s132, %s134
      %p138 = scmp.eq.s32.totalorder %s25, 0
      %p139 = por %p137, %p138
      %p140 = scmp.ne.s32.totalorder %s132, %s134
      %p141 = scmp.eq.s32.totalorder %s30, 1
      %p142 = por %p140, %p141
      %p143 = scmp.ne.s32.totalorder %s134, %s135
      %p144 = scmp.eq.s32.totalorder %s30, 0
      %p145 = por %p143, %p144
      %p146 = scmp.ne.s32.totalorder %s134, %s135
      %p147 = scmp.eq.s32.totalorder %s31, 1
      %p148 = por %p146, %p147
      %p150 = scmp.ne.s32.totalorder %s135, %s149
      %p151 = scmp.eq.s32.totalorder %s31, 0
      %p152 = por %p150, %p151
      %s154 = sadd.s32 %s153, 1
      %p157 = scmp.eq.s32.totalorder %s25, 1
      %p158 = scmp.ne.s32.totalorder %s153, %s155
      %p159 = scmp.eq.s32.totalorder %s25, 0
      %p160 = por %p158, %p159
      %p161 = scmp.ne.s32.totalorder %s153, %s155
      %p162 = scmp.eq.s32.totalorder %s30, 1
      %p163 = por %p161, %p162
      %p164 = scmp.ne.s32.totalorder %s155, %s156
      %p165 = scmp.eq.s32.totalorder %s30, 0
      %p166 = por %p164, %p165
      %p167 = scmp.ne.s32.totalorder %s155, %s156
      %p168 = scmp.eq.s32.totalorder %s31, 1
      %p169 = por %p167, %p168
      %p171 = scmp.ne.s32.totalorder %s156, %s170
      %p172 = scmp.eq.s32.totalorder %s31, 0
      %p173 = por %p171, %p172
      %s175 = sadd.s32 %s174, 1
      %p178 = scmp.eq.s32.totalorder %s25, 1
      %p179 = scmp.ne.s32.totalorder %s174, %s176
      %p180 = scmp.eq.s32.totalorder %s25, 0
      %p181 = por %p179, %p180
      %p182 = scmp.ne.s32.totalorder %s174, %s176
      %p183 = scmp.eq.s32.totalorder %s30, 1
      %p184 = por %p182, %p183
      %p185 = scmp.ne.s32.totalorder %s176, %s177
      %p186 = scmp.eq.s32.totalorder %s30, 0
      %p187 = por %p185, %p186
      %p188 = scmp.ne.s32.totalorder %s176, %s177
      %p189 = scmp.eq.s32.totalorder %s31, 1
      %p190 = por %p188, %p189
      %p192 = scmp.ne.s32.totalorder %s177, %s191
      %p193 = scmp.eq.s32.totalorder %s31, 0
      %p194 = por %p192, %p193
      %s196 = sadd.s32 %s195, 1
      %p199 = scmp.eq.s32.totalorder %s25, 1
      %p200 = scmp.ne.s32.totalorder %s195, %s197
      %p201 = scmp.eq.s32.totalorder %s25, 0
      %p202 = por %p200, %p201
      %p203 = scmp.ne.s32.totalorder %s195, %s197
      %p204 = scmp.eq.s32.totalorder %s30, 1
      %p205 = por %p203, %p204
      %p206 = scmp.ne.s32.totalorder %s197, %s198
      %p207 = scmp.eq.s32.totalorder %s30, 0
      %p208 = por %p206, %p207
      %p209 = scmp.ne.s32.totalorder %s197, %s198
      %p210 = scmp.eq.s32.totalorder %s31, 1
      %p211 = por %p209, %p210
      %p213 = scmp.ne.s32.totalorder %s198, %s212
      %p214 = scmp.eq.s32.totalorder %s31, 0
      %p215 = por %p213, %p214
      %s216 = ssub.s32 %s25, %s32
      %p217 = scmp.eq.s32.totalorder %s216, 0
      %s219 = sadd.s32 %s218, 1
      %s220 = scalar_select %p217, %s218, %s219
      %p223 = pneg %p217
      %p224 = scmp.eq.s32.totalorder %s25, 1
      %p225 = por %p223, %p224
      %p226 = scmp.ne.s32.totalorder %s218, %s221
      %p227 = scmp.eq.s32.totalorder %s25, 0
      %p228 = por %p226, %p227
      %p229 = scmp.ne.s32.totalorder %s218, %s221
      %p230 = scmp.eq.s32.totalorder %s30, 1
      %p231 = por %p229, %p230
      %p232 = scmp.ne.s32.totalorder %s221, %s222
      %p233 = scmp.eq.s32.totalorder %s30, 0
      %p234 = por %p232, %p233
      %p235 = scmp.ne.s32.totalorder %s221, %s222
      %p236 = scmp.eq.s32.totalorder %s31, 1
      %p237 = por %p235, %p236
      %p239 = scmp.ne.s32.totalorder %s222, %s238
      %p240 = scmp.eq.s32.totalorder %s31, 0
      %p241 = por %p239, %p240
      %p242 = scmp.le.s32.totalorder 1, %s25
      %p243 = scmp.lt.s32.totalorder %s25, 3
      %p244 = pnand %p242, %p243
      %p245 = pneg %p244
      // Predicated region
      $region9: #{tpu_custom_call.1} parent=5 // pred_check
        _
      $region10: #{tpu_custom_call.1} parent=5 // pred_check_branch
        %247 = sbr.rel (%p244) target = $region12
      $region11: #{tpu_custom_call.1} parent=5 // pred_region
        %s248 = ssub.s32 %s25, 1
        // Predicated region
        $region13: #{tpu_custom_call.1} parent=11 // pred_check
          %p249 = pneg %p124
        $region14: #{tpu_custom_call.1} parent=11 // pred_check_branch
          %251 = sbr.rel (%p249) target = $region16
        $region15: #{tpu_custom_call.1} parent=11 // pred_region
          %s253 = ssub.s32 2048, 2048
          %254 = vsyncadd [#allocation10], %s253
          %s255 = sshll.u32 [#allocation9], 4
          %s256 = int_to_ptr.vmem [resolvable:$true] %s255
          %261 = dma.hbm_to_vmem [thread:$0]  %s3, 2048, %s256, [#allocation10], 128, 128, 8
        $region16: #{tpu_custom_call.1} parent=11 // pred_fallthru
          _
        // Predicated region
        $region17: #{tpu_custom_call.1} parent=11 // pred_check
          %p262 = pneg %p145
        $region18: #{tpu_custom_call.1} parent=11 // pred_check_branch
          %264 = sbr.rel (%p262) target = $region20
        $region19: #{tpu_custom_call.1} parent=11 // pred_region
          %s266 = ssub.s32 2048, 2048
          %267 = vsyncadd [#allocation10], %s266
          %s268 = sshll.u32 [#allocation11], 4
          %s269 = int_to_ptr.vmem [resolvable:$true] %s268
          %274 = dma.hbm_to_vmem [thread:$0]  %s4, 2048, %s269, [#allocation10], 128, 128, 8
        $region20: #{tpu_custom_call.1} parent=11 // pred_fallthru
          _
        // Predicated region
        $region21: #{tpu_custom_call.1} parent=11 // pred_check
          %p275 = pneg %p166
        $region22: #{tpu_custom_call.1} parent=11 // pred_check_branch
          %277 = sbr.rel (%p275) target = $region24
        $region23: #{tpu_custom_call.1} parent=11 // pred_region
          %s279 = ssub.s32 2048, 2048
          %280 = vsyncadd [#allocation13], %s279
          %s281 = sshll.u32 [#allocation12], 4
          %s282 = int_to_ptr.vmem [resolvable:$true] %s281
          %287 = dma.hbm_to_vmem [thread:$0]  %s5, 2048, %s282, [#allocation13], 128, 128, 8
        $region24: #{tpu_custom_call.1} parent=11 // pred_fallthru
          _
        // Predicated region
        $region25: #{tpu_custom_call.1} parent=11 // pred_check
          %p288 = pneg %p187
        $region26: #{tpu_custom_call.1} parent=11 // pred_check_branch
          %290 = sbr.rel (%p288) target = $region28
        $region27: #{tpu_custom_call.1} parent=11 // pred_region
          %s292 = ssub.s32 2048, 2048
          %293 = vsyncadd [#allocation13], %s292
          %s294 = sshll.u32 [#allocation14], 4
          %s295 = int_to_ptr.vmem [resolvable:$true] %s294
          %300 = dma.hbm_to_vmem [thread:$0]  %s6, 2048, %s295, [#allocation13], 128, 128, 8
        $region28: #{tpu_custom_call.1} parent=11 // pred_fallthru
          _
        // Predicated region
        $region29: #{tpu_custom_call.1} parent=11 // pred_check
          %p301 = pneg %p208
        $region30: #{tpu_custom_call.1} parent=11 // pred_check_branch
          %303 = sbr.rel (%p301) target = $region32
        $region31: #{tpu_custom_call.1} parent=11 // pred_region
          _
        $region32: #{tpu_custom_call.1} parent=11 // pred_fallthru
          _
      $region12: #{tpu_custom_call.1} parent=5 // pred_fallthru
        _
      %p304 = scmp.lt.s32.totalorder %s25, 2
      // Predicated region
      $region33: #{tpu_custom_call.1} parent=5 // pred_check
        %p305 = pneg %p304
      $region34: #{tpu_custom_call.1} parent=5 // pred_check_branch
        %307 = sbr.rel (%p305) target = $region36
      $region35: #{tpu_custom_call.1} parent=5 // pred_region
        // Predicated region
        $region37: #{tpu_custom_call.1} parent=35 // pred_check
          %p308 = pneg %p45
        $region38: #{tpu_custom_call.1} parent=35 // pred_check_branch
          %310 = sbr.rel (%p308) target = $region40
        $region39: #{tpu_custom_call.1} parent=35 // pred_region
          %s311 = sand.u32 %s35, 1
          %s312 = scalar_lea.sflag [#allocation4], %s311
          %s313 = sand.u32 %s35, 1
          %s314 = smul.addr %s313, 8
          %s315 = scalar_lea.vmem [#allocation3], %s314
          %s317 = ssub.s32 128, 128
          %318 = vsyncadd %s312, %s317
          %s319 = smul.addr %s25, 128
          %s320 = scalar_lea.hbm %s0, %s319
          %s322 = sshll.u32 %s315, 4
          %s323 = int_to_ptr.vmem [resolvable:$true] %s322
          %325 = dma.hbm_to_vmem [thread:$0]  %s320, 128, %s323, %s312
        $region40: #{tpu_custom_call.1} parent=35 // pred_fallthru
          _
        // Predicated region
        $region41: #{tpu_custom_call.1} parent=35 // pred_check
          %p326 = pneg %p71
        $region42: #{tpu_custom_call.1} parent=35 // pred_check_branch
          %328 = sbr.rel (%p326) target = $region44
        $region43: #{tpu_custom_call.1} parent=35 // pred_region
          %s329 = sand.u32 %s25, 1
          %s330 = scalar_lea.sflag [#allocation7], %s329
          %s331 = sand.u32 %s61, 1
          %s332 = smul.addr %s331, 8
          %s333 = scalar_lea.vmem [#allocation6], %s332
          %s335 = ssub.s32 128, 128
          %336 = vsyncadd %s330, %s335
          %s337 = smul.addr %s25, 128
          %s338 = scalar_lea.hbm %s1, %s337
          %s340 = sshll.u32 %s333, 4
          %s341 = int_to_ptr.vmem [resolvable:$true] %s340
          %343 = dma.hbm_to_vmem [thread:$0]  %s338, 128, %s341, %s330
        $region44: #{tpu_custom_call.1} parent=35 // pred_fallthru
          _
        // Predicated region
        $region45: #{tpu_custom_call.1} parent=35 // pred_check
          %p344 = pneg %p97
        $region46: #{tpu_custom_call.1} parent=35 // pred_check_branch
          %346 = sbr.rel (%p344) target = $region48
        $region47: #{tpu_custom_call.1} parent=35 // pred_region
          %s347 = sand.u32 %s25, 1
          %s348 = scalar_lea.sflag [#allocation7], %s347
          %s349 = sand.u32 %s87, 1
          %s350 = smul.addr %s349, 8
          %s351 = scalar_lea.vmem [#allocation8], %s350
          %s353 = ssub.s32 128, 128
          %354 = vsyncadd %s348, %s353
          %s355 = smul.addr %s25, 128
          %s356 = scalar_lea.hbm %s2, %s355
          %s358 = sshll.u32 %s351, 4
          %s359 = int_to_ptr.vmem [resolvable:$true] %s358
          %361 = dma.hbm_to_vmem [thread:$0]  %s356, 128, %s359, %s348
        $region48: #{tpu_custom_call.1} parent=35 // pred_fallthru
          _
      $region36: #{tpu_custom_call.1} parent=5 // pred_fallthru
        _
      %p362 = scmp.le.s32.totalorder 1, %s25
      %p363 = scmp.lt.s32.totalorder %s25, 3
      %p364 = pnand %p362, %p363
      %p365 = pneg %p364
      // Predicated region
      $region49: #{tpu_custom_call.1} parent=5 // pred_check
        _
      $region50: #{tpu_custom_call.1} parent=5 // pred_check_branch
        %367 = sbr.rel (%p364) target = $region52
      $region51: #{tpu_custom_call.1} parent=5 // pred_region
        %s368 = ssub.s32 %s25, 1
        %s369 = sand.u32 %s38, 1
        %s370 = scalar_lea.sflag [#allocation4], %s369
        %s371 = sand.u32 %s38, 1
        %s372 = smul.addr %s371, 8
        %s373 = scalar_lea.vmem [#allocation3], %s372
        // Predicated region
        $region53: #{tpu_custom_call.1} parent=51 // pred_check
          %p374 = pneg %p51
        $region54: #{tpu_custom_call.1} parent=51 // pred_check_branch
          %376 = sbr.rel (%p374) target = $region56
        $region55: #{tpu_custom_call.1} parent=51 // pred_region
          %377 = dma.done %s370, 128
        $region56: #{tpu_custom_call.1} parent=51 // pred_fallthru
          _
        %s378 = sand.u32 %s30, 1
        %s379 = scalar_lea.sflag [#allocation7], %s378
        %s380 = sand.u32 %s64, 1
        %s381 = smul.addr %s380, 8
        %s382 = scalar_lea.vmem [#allocation6], %s381
        // Predicated region
        $region57: #{tpu_custom_call.1} parent=51 // pred_check
          %p383 = pneg %p77
        $region58: #{tpu_custom_call.1} parent=51 // pred_check_branch
          %385 = sbr.rel (%p383) target = $region60
        $region59: #{tpu_custom_call.1} parent=51 // pred_region
          %386 = dma.done %s379, 128
        $region60: #{tpu_custom_call.1} parent=51 // pred_fallthru
          _
        %s387 = sand.u32 %s30, 1
        %s388 = scalar_lea.sflag [#allocation7], %s387
        %s389 = sand.u32 %s90, 1
        %s390 = smul.addr %s389, 8
        %s391 = scalar_lea.vmem [#allocation8], %s390
        // Predicated region
        $region61: #{tpu_custom_call.1} parent=51 // pred_check
          %p392 = pneg %p103
        $region62: #{tpu_custom_call.1} parent=51 // pred_check_branch
          %394 = sbr.rel (%p392) target = $region64
        $region63: #{tpu_custom_call.1} parent=51 // pred_region
          %395 = dma.done %s388, 128
        $region64: #{tpu_custom_call.1} parent=51 // pred_fallthru
          _
        // Predicated region
        $region65: #{tpu_custom_call.1} parent=51 // pred_check
          %p396 = pneg %p124
        $region66: #{tpu_custom_call.1} parent=51 // pred_check_branch
          %398 = sbr.rel (%p396) target = $region68
        $region67: #{tpu_custom_call.1} parent=51 // pred_region
          %399 = dma.done [#allocation10], 2048
        $region68: #{tpu_custom_call.1} parent=51 // pred_fallthru
          _
        // Predicated region
        $region69: #{tpu_custom_call.1} parent=51 // pred_check
          %p400 = pneg %p145
        $region70: #{tpu_custom_call.1} parent=51 // pred_check_branch
          %402 = sbr.rel (%p400) target = $region72
        $region71: #{tpu_custom_call.1} parent=51 // pred_region
          %403 = dma.done [#allocation10], 2048
        $region72: #{tpu_custom_call.1} parent=51 // pred_fallthru
          _
        // Predicated region
        $region73: #{tpu_custom_call.1} parent=51 // pred_check
          %p404 = pneg %p166
        $region74: #{tpu_custom_call.1} parent=51 // pred_check_branch
          %406 = sbr.rel (%p404) target = $region76
        $region75: #{tpu_custom_call.1} parent=51 // pred_region
          %407 = dma.done [#allocation13], 2048
        $region76: #{tpu_custom_call.1} parent=51 // pred_fallthru
          _
        // Predicated region
        $region77: #{tpu_custom_call.1} parent=51 // pred_check
          %p408 = pneg %p187
        $region78: #{tpu_custom_call.1} parent=51 // pred_check_branch
          %410 = sbr.rel (%p408) target = $region80
        $region79: #{tpu_custom_call.1} parent=51 // pred_region
          %411 = dma.done [#allocation13], 2048
        $region80: #{tpu_custom_call.1} parent=51 // pred_fallthru
          _
        %s412 = sand.u32 %s38, 1
        %s413 = scalar_lea.sflag [#allocation4], %s412
        %s414 = sand.u32 %s38, 1
        %s415 = smul.addr %s414, 8
        %s416 = scalar_lea.vmem [#allocation3], %s415
        %p417 = pneg %p51
        %p418 = pneg %p48
        %s419 = sand.u32 %s30, 1
        %s420 = scalar_lea.sflag [#allocation7], %s419
        %s421 = sand.u32 %s64, 1
        %s422 = smul.addr %s421, 8
        %s423 = scalar_lea.vmem [#allocation6], %s422
        %p424 = pneg %p77
        %p425 = pneg %p74
        %s426 = sand.u32 %s30, 1
        %s427 = scalar_lea.sflag [#allocation7], %s426
        %s428 = sand.u32 %s90, 1
        %s429 = smul.addr %s428, 8
        %s430 = scalar_lea.vmem [#allocation8], %s429
        %p431 = pneg %p103
        %p432 = pneg %p100
        %p433 = pneg %p124
        %p434 = pneg %p121
        %p435 = pneg %p145
        %p436 = pneg %p142
        %p437 = pneg %p166
        %p438 = pneg %p163
        %p439 = pneg %p187
        %p440 = pneg %p184
        %p441 = pneg %p208
        %p442 = pneg %p205
        %p443 = pneg %p234
        %p444 = pneg %p231
        %s445 = sand.u32 %s221, 1
        %s446 = scalar_lea.sflag [#allocation5], %s445
        %s447 = sand.u32 %s221, 1
        %s448 = smul.addr %s447, 8
        %s449 = scalar_lea.vmem [#allocation15], %s448
        %v450 = vld [vmem:[%s373] sm:$0xff]
        %v451 = vld [vmem:[%s382] sm:$0xff]
        %v452 = vld [vmem:[%s391] sm:$0xff]
        %v453 = vld [vmem:[#allocation9] sm:$0xff]
        %v454 = vld [vmem:[#allocation9 + $0x8] sm:$0xff]
        %v455 = vld [vmem:[#allocation9 + $0x10] sm:$0xff]
        %v456 = vld [vmem:[#allocation9 + $0x18] sm:$0xff]
        %v457 = vld [vmem:[#allocation9 + $0x20] sm:$0xff]
        %v458 = vld [vmem:[#allocation9 + $0x28] sm:$0xff]
        %v459 = vld [vmem:[#allocation9 + $0x30] sm:$0xff]
        %v460 = vld [vmem:[#allocation9 + $0x38] sm:$0xff]
        %v461 = vld [vmem:[#allocation9 + $0x40] sm:$0xff]
        %v462 = vld [vmem:[#allocation9 + $0x48] sm:$0xff]
        %v463 = vld [vmem:[#allocation9 + $0x50] sm:$0xff]
        %v464 = vld [vmem:[#allocation9 + $0x58] sm:$0xff]
        %v465 = vld [vmem:[#allocation9 + $0x60] sm:$0xff]
        %v466 = vld [vmem:[#allocation9 + $0x68] sm:$0xff]
        %v467 = vld [vmem:[#allocation9 + $0x70] sm:$0xff]
        %v468 = vld [vmem:[#allocation9 + $0x78] sm:$0xff]
        %469 = vmatprep.subr.mxu0 0.0
        %470 = vmatpush1.msra.mxu0 %v468
        %471 = vmatprep.subr.mxu0 0.0
        %472 = vmatpush1.msra.mxu0 %v467
        %473 = vmatprep.subr.mxu0 0.0
        %474 = vmatpush1.msra.mxu0 %v466
        %475 = vmatprep.subr.mxu0 0.0
        %476 = vmatpush1.msra.mxu0 %v465
        %477 = vmatprep.subr.mxu0 0.0
        %478 = vmatpush1.msra.mxu0 %v464
        %479 = vmatprep.subr.mxu0 0.0
        %480 = vmatpush1.msra.mxu0 %v463
        %481 = vmatprep.subr.mxu0 0.0
        %482 = vmatpush1.msra.mxu0 %v462
        %483 = vmatprep.subr.mxu0 0.0
        %484 = vmatpush1.msra.mxu0 %v461
        %485 = vmatprep.subr.mxu0 0.0
        %486 = vmatpush1.msra.mxu0 %v460
        %487 = vmatprep.subr.mxu0 0.0
        %488 = vmatpush1.msra.mxu0 %v459
        %489 = vmatprep.subr.mxu0 0.0
        %490 = vmatpush1.msra.mxu0 %v458
        %491 = vmatprep.subr.mxu0 0.0
        %492 = vmatpush1.msra.mxu0 %v457
        %493 = vmatprep.subr.mxu0 0.0
        %494 = vmatpush1.msra.mxu0 %v456
        %495 = vmatprep.subr.mxu0 0.0
        %496 = vmatpush1.msra.mxu0 %v455
        %497 = vmatprep.subr.mxu0 0.0
        %498 = vmatpush1.msra.mxu0 %v454
        %499 = vmatprep.subr.mxu0 0.0
        %500 = vmatpush1.msra.mxu0 %v453
        %501 = vmatprep.subr.mxu0 0.0
        %502 = vmatpush2.msra.mxu0 0.0
        %503 = vmatprep.subr.mxu0 0.0
        %504 = vmatpush2.msra.mxu0 0.0
        %505 = vmatprep.subr.mxu0 0.0
        %506 = vmatpush2.msra.mxu0 0.0
        %507 = vmatprep.subr.mxu0 0.0
        %508 = vmatpush2.msra.mxu0 0.0
        %509 = vmatprep.subr.mxu0 0.0
        %510 = vmatpush2.msra.mxu0 0.0
        %511 = vmatprep.subr.mxu0 0.0
        %512 = vmatpush2.msra.mxu0 0.0
        %513 = vmatprep.subr.mxu0 0.0
        %514 = vmatpush2.msra.mxu0 0.0
        %515 = vmatprep.subr.mxu0 0.0
        %516 = vmatpush2.msra.mxu0 0.0
        %517 = vmatprep.subr.mxu0 0.0
        %518 = vmatpush2.msra.mxu0 0.0
        %519 = vmatprep.subr.mxu0 0.0
        %520 = vmatpush2.msra.mxu0 0.0
        %521 = vmatprep.subr.mxu0 0.0
        %522 = vmatpush2.msra.mxu0 0.0
        %523 = vmatprep.subr.mxu0 0.0
        %524 = vmatpush2.msra.mxu0 0.0
        %525 = vmatprep.subr.mxu0 0.0
        %526 = vmatpush2.msra.mxu0 0.0
        %527 = vmatprep.subr.mxu0 0.0
        %528 = vmatpush2.msra.mxu0 0.0
        %529 = vmatprep.subr.mxu0 0.0
        %530 = vmatpush2.msra.mxu0 0.0
        %531 = vmatprep.subr.mxu0 0.0
        %532 = vmatpush2.msra.mxu0 0.0
        %533 = vmatprep.mubr.f32.mxu0 0.0
        %534 = vmatmul.mubr.f32.gmra.mxu0 %v450
        %v535 = vpop.f32.mrf.mxu0
        %v536 = vadd.f32 0.0, %v535
        %v537 = vpop.f32.mrf.mxu0
        %538 = vdwg.mxu0
        %v539 = vld [vmem:[#allocation11] sm:$0xff]
        %v540 = vld [vmem:[#allocation11 + $0x8] sm:$0xff]
        %v541 = vld [vmem:[#allocation11 + $0x10] sm:$0xff]
        %v542 = vld [vmem:[#allocation11 + $0x18] sm:$0xff]
        %v543 = vld [vmem:[#allocation11 + $0x20] sm:$0xff]
        %v544 = vld [vmem:[#allocation11 + $0x28] sm:$0xff]
        %v545 = vld [vmem:[#allocation11 + $0x30] sm:$0xff]
        %v546 = vld [vmem:[#allocation11 + $0x38] sm:$0xff]
        %v547 = vld [vmem:[#allocation11 + $0x40] sm:$0xff]
        %v548 = vld [vmem:[#allocation11 + $0x48] sm:$0xff]
        %v549 = vld [vmem:[#allocation11 + $0x50] sm:$0xff]
        %v550 = vld [vmem:[#allocation11 + $0x58] sm:$0xff]
        %v551 = vld [vmem:[#allocation11 + $0x60] sm:$0xff]
        %v552 = vld [vmem:[#allocation11 + $0x68] sm:$0xff]
        %v553 = vld [vmem:[#allocation11 + $0x70] sm:$0xff]
        %v554 = vld [vmem:[#allocation11 + $0x78] sm:$0xff]
        %555 = vmatprep.subr.mxu0 0.0
        %556 = vmatpush1.msra.mxu0 %v554
        %557 = vmatprep.subr.mxu0 0.0
        %558 = vmatpush1.msra.mxu0 %v553
        %559 = vmatprep.subr.mxu0 0.0
        %560 = vmatpush1.msra.mxu0 %v552
        %561 = vmatprep.subr.mxu0 0.0
        %562 = vmatpush1.msra.mxu0 %v551
        %563 = vmatprep.subr.mxu0 0.0
        %564 = vmatpush1.msra.mxu0 %v550
        %565 = vmatprep.subr.mxu0 0.0
        %566 = vmatpush1.msra.mxu0 %v549
        %567 = vmatprep.subr.mxu0 0.0
        %568 = vmatpush1.msra.mxu0 %v548
        %569 = vmatprep.subr.mxu0 0.0
        %570 = vmatpush1.msra.mxu0 %v547
        %571 = vmatprep.subr.mxu0 0.0
        %572 = vmatpush1.msra.mxu0 %v546
        %573 = vmatprep.subr.mxu0 0.0
        %574 = vmatpush1.msra.mxu0 %v545
        %575 = vmatprep.subr.mxu0 0.0
        %576 = vmatpush1.msra.mxu0 %v544
        %577 = vmatprep.subr.mxu0 0.0
        %578 = vmatpush1.msra.mxu0 %v543
        %579 = vmatprep.subr.mxu0 0.0
        %580 = vmatpush1.msra.mxu0 %v542
        %581 = vmatprep.subr.mxu0 0.0
        %582 = vmatpush1.msra.mxu0 %v541
        %583 = vmatprep.subr.mxu0 0.0
        %584 = vmatpush1.msra.mxu0 %v540
        %585 = vmatprep.subr.mxu0 0.0
        %586 = vmatpush1.msra.mxu0 %v539
        %587 = vmatprep.subr.mxu0 0.0
        %588 = vmatpush2.msra.mxu0 0.0
        %589 = vmatprep.subr.mxu0 0.0
        %590 = vmatpush2.msra.mxu0 0.0
        %591 = vmatprep.subr.mxu0 0.0
        %592 = vmatpush2.msra.mxu0 0.0
        %593 = vmatprep.subr.mxu0 0.0
        %594 = vmatpush2.msra.mxu0 0.0
        %595 = vmatprep.subr.mxu0 0.0
        %596 = vmatpush2.msra.mxu0 0.0
        %597 = vmatprep.subr.mxu0 0.0
        %598 = vmatpush2.msra.mxu0 0.0
        %599 = vmatprep.subr.mxu0 0.0
        %600 = vmatpush2.msra.mxu0 0.0
        %601 = vmatprep.subr.mxu0 0.0
        %602 = vmatpush2.msra.mxu0 0.0
        %603 = vmatprep.subr.mxu0 0.0
        %604 = vmatpush2.msra.mxu0 0.0
        %605 = vmatprep.subr.mxu0 0.0
        %606 = vmatpush2.msra.mxu0 0.0
        %607 = vmatprep.subr.mxu0 0.0
        %608 = vmatpush2.msra.mxu0 0.0
        %609 = vmatprep.subr.mxu0 0.0
        %610 = vmatpush2.msra.mxu0 0.0
        %611 = vmatprep.subr.mxu0 0.0
        %612 = vmatpush2.msra.mxu0 0.0
        %613 = vmatprep.subr.mxu0 0.0
        %614 = vmatpush2.msra.mxu0 0.0
        %615 = vmatprep.subr.mxu0 0.0
        %616 = vmatpush2.msra.mxu0 0.0
        %617 = vmatprep.subr.mxu0 0.0
        %618 = vmatpush2.msra.mxu0 0.0
        %619 = vmatprep.mubr.f32.mxu0 0.0
        %620 = vmatmul.mubr.f32.gmra.mxu0 %v451
        %v621 = vpop.f32.mrf.mxu0
        %v622 = vadd.f32 0.0, %v621
        %v623 = vpop.f32.mrf.mxu0
        %624 = vdwg.mxu0
        %v625 = vld [vmem:[#allocation12] sm:$0xff]
        %v626 = vld [vmem:[#allocation12 + $0x8] sm:$0xff]
        %v627 = vld [vmem:[#allocation12 + $0x10] sm:$0xff]
        %v628 = vld [vmem:[#allocation12 + $0x18] sm:$0xff]
        %v629 = vld [vmem:[#allocation12 + $0x20] sm:$0xff]
        %v630 = vld [vmem:[#allocation12 + $0x28] sm:$0xff]
        %v631 = vld [vmem:[#allocation12 + $0x30] sm:$0xff]
        %v632 = vld [vmem:[#allocation12 + $0x38] sm:$0xff]
        %v633 = vld [vmem:[#allocation12 + $0x40] sm:$0xff]
        %v634 = vld [vmem:[#allocation12 + $0x48] sm:$0xff]
        %v635 = vld [vmem:[#allocation12 + $0x50] sm:$0xff]
        %v636 = vld [vmem:[#allocation12 + $0x58] sm:$0xff]
        %v637 = vld [vmem:[#allocation12 + $0x60] sm:$0xff]
        %v638 = vld [vmem:[#allocation12 + $0x68] sm:$0xff]
        %v639 = vld [vmem:[#allocation12 + $0x70] sm:$0xff]
        %v640 = vld [vmem:[#allocation12 + $0x78] sm:$0xff]
        %641 = vmatprep.subr.mxu0 0.0
        %642 = vmatpush1.msra.mxu0 %v640
        %643 = vmatprep.subr.mxu0 0.0
        %644 = vmatpush1.msra.mxu0 %v639
        %645 = vmatprep.subr.mxu0 0.0
        %646 = vmatpush1.msra.mxu0 %v638
        %647 = vmatprep.subr.mxu0 0.0
        %648 = vmatpush1.msra.mxu0 %v637
        %649 = vmatprep.subr.mxu0 0.0
        %650 = vmatpush1.msra.mxu0 %v636
        %651 = vmatprep.subr.mxu0 0.0
        %652 = vmatpush1.msra.mxu0 %v635
        %653 = vmatprep.subr.mxu0 0.0
        %654 = vmatpush1.msra.mxu0 %v634
        %655 = vmatprep.subr.mxu0 0.0
        %656 = vmatpush1.msra.mxu0 %v633
        %657 = vmatprep.subr.mxu0 0.0
        %658 = vmatpush1.msra.mxu0 %v632
        %659 = vmatprep.subr.mxu0 0.0
        %660 = vmatpush1.msra.mxu0 %v631
        %661 = vmatprep.subr.mxu0 0.0
        %662 = vmatpush1.msra.mxu0 %v630
        %663 = vmatprep.subr.mxu0 0.0
        %664 = vmatpush1.msra.mxu0 %v629
        %665 = vmatprep.subr.mxu0 0.0
        %666 = vmatpush1.msra.mxu0 %v628
        %667 = vmatprep.subr.mxu0 0.0
        %668 = vmatpush1.msra.mxu0 %v627
        %669 = vmatprep.subr.mxu0 0.0
        %670 = vmatpush1.msra.mxu0 %v626
        %671 = vmatprep.subr.mxu0 0.0
        %672 = vmatpush1.msra.mxu0 %v625
        %673 = vmatprep.subr.mxu0 0.0
        %674 = vmatpush2.msra.mxu0 0.0
        %675 = vmatprep.subr.mxu0 0.0
        %676 = vmatpush2.msra.mxu0 0.0
        %677 = vmatprep.subr.mxu0 0.0
        %678 = vmatpush2.msra.mxu0 0.0
        %679 = vmatprep.subr.mxu0 0.0
        %680 = vmatpush2.msra.mxu0 0.0
        %681 = vmatprep.subr.mxu0 0.0
        %682 = vmatpush2.msra.mxu0 0.0
        %683 = vmatprep.subr.mxu0 0.0
        %684 = vmatpush2.msra.mxu0 0.0
        %685 = vmatprep.subr.mxu0 0.0
        %686 = vmatpush2.msra.mxu0 0.0
        %687 = vmatprep.subr.mxu0 0.0
        %688 = vmatpush2.msra.mxu0 0.0
        %689 = vmatprep.subr.mxu0 0.0
        %690 = vmatpush2.msra.mxu0 0.0
        %691 = vmatprep.subr.mxu0 0.0
        %692 = vmatpush2.msra.mxu0 0.0
        %693 = vmatprep.subr.mxu0 0.0
        %694 = vmatpush2.msra.mxu0 0.0
        %695 = vmatprep.subr.mxu0 0.0
        %696 = vmatpush2.msra.mxu0 0.0
        %697 = vmatprep.subr.mxu0 0.0
        %698 = vmatpush2.msra.mxu0 0.0
        %699 = vmatprep.subr.mxu0 0.0
        %700 = vmatpush2.msra.mxu0 0.0
        %701 = vmatprep.subr.mxu0 0.0
        %702 = vmatpush2.msra.mxu0 0.0
        %703 = vmatprep.subr.mxu0 0.0
        %704 = vmatpush2.msra.mxu0 0.0
        %705 = vmatprep.mubr.f32.mxu0 0.0
        %706 = vmatmul.mubr.f32.gmra.mxu0 %v451
        %v707 = vpop.f32.mrf.mxu0
        %v708 = vadd.f32 0.0, %v707
        %v709 = vpop.f32.mrf.mxu0
        %710 = vdwg.mxu0
        %vm711 = vcmask 261120
        %v713 = vsel %vm711, %v536, 0
        %v716 = vsel %vm711, %v622, 0
        %718 = vmatprep.subr.mxu0 0.0
        %719 = vmatpush1.xpose.msra.mxu0 0.0
        %720 = vmatprep.subr.mxu0 0.0
        %721 = vmatpush1.xpose.msra.mxu0 0.0
        %722 = vmatprep.subr.mxu0 0.0
        %723 = vmatpush1.xpose.msra.mxu0 0.0
        %724 = vmatprep.subr.mxu0 0.0
        %725 = vmatpush1.xpose.msra.mxu0 0.0
        %726 = vmatprep.subr.mxu0 0.0
        %727 = vmatpush1.xpose.msra.mxu0 0.0
        %728 = vmatprep.subr.mxu0 0.0
        %729 = vmatpush1.xpose.msra.mxu0 0.0
        %730 = vmatprep.subr.mxu0 0.0
        %731 = vmatpush1.xpose.msra.mxu0 0.0
        %732 = vmatprep.subr.mxu0 0.0
        %733 = vmatpush1.xpose.msra.mxu0 0.0
        %734 = vmatprep.subr.mxu0 0.0
        %735 = vmatpush1.xpose.msra.mxu0 0.0
        %736 = vmatprep.subr.mxu0 0.0
        %737 = vmatpush1.xpose.msra.mxu0 0.0
        %738 = vmatprep.subr.mxu0 0.0
        %739 = vmatpush1.xpose.msra.mxu0 0.0
        %740 = vmatprep.subr.mxu0 0.0
        %741 = vmatpush1.xpose.msra.mxu0 0.0
        %742 = vmatprep.subr.mxu0 0.0
        %743 = vmatpush1.xpose.msra.mxu0 0.0
        %744 = vmatprep.subr.mxu0 0.0
        %745 = vmatpush1.xpose.msra.mxu0 0.0
        %746 = vmatprep.subr.mxu0 0.0
        %747 = vmatpush1.xpose.msra.mxu0 0.0
        %748 = vmatprep.subr.mxu0 0.0
        %749 = vmatpush1.xpose.msra.mxu0 %v716
        %750 = vmatprep.subr.mxu0 0.0
        %751 = vmatpush2.xpose.msra.mxu0 0.0
        %752 = vmatprep.subr.mxu0 0.0
        %753 = vmatpush2.xpose.msra.mxu0 0.0
        %754 = vmatprep.subr.mxu0 0.0
        %755 = vmatpush2.xpose.msra.mxu0 0.0
        %756 = vmatprep.subr.mxu0 0.0
        %757 = vmatpush2.xpose.msra.mxu0 0.0
        %758 = vmatprep.subr.mxu0 0.0
        %759 = vmatpush2.xpose.msra.mxu0 0.0
        %760 = vmatprep.subr.mxu0 0.0
        %761 = vmatpush2.xpose.msra.mxu0 0.0
        %762 = vmatprep.subr.mxu0 0.0
        %763 = vmatpush2.xpose.msra.mxu0 0.0
        %764 = vmatprep.subr.mxu0 0.0
        %765 = vmatpush2.xpose.msra.mxu0 0.0
        %766 = vmatprep.subr.mxu0 0.0
        %767 = vmatpush2.xpose.msra.mxu0 0.0
        %768 = vmatprep.subr.mxu0 0.0
        %769 = vmatpush2.xpose.msra.mxu0 0.0
        %770 = vmatprep.subr.mxu0 0.0
        %771 = vmatpush2.xpose.msra.mxu0 0.0
        %772 = vmatprep.subr.mxu0 0.0
        %773 = vmatpush2.xpose.msra.mxu0 0.0
        %774 = vmatprep.subr.mxu0 0.0
        %775 = vmatpush2.xpose.msra.mxu0 0.0
        %776 = vmatprep.subr.mxu0 0.0
        %777 = vmatpush2.xpose.msra.mxu0 0.0
        %778 = vmatprep.subr.mxu0 0.0
        %779 = vmatpush2.xpose.msra.mxu0 0.0
        %780 = vmatprep.subr.mxu0 0.0
        %781 = vmatpush2.xpose.msra.mxu0 0.0
        %782 = vmatprep.mubr.f32.mxu0 0.0
        %783 = vmatmul.mubr.f32.gmra.mxu0 %v713
        %v784 = vpop.f32.mrf.mxu0
        %v785 = vadd.f32 0.0, %v784
        %v786 = vpop.f32.mrf.mxu0
        %787 = vdwg.mxu0
        %v788 = vmul.f32 %v785, 0.17677669
        %vm789 = vcmp.gt.f32.partialorder %v452, 0.0
        %v790 = vsel %vm789, -1e+09, %v788
        %vm791 = vcmask 64512
        %v792 = vsel %vm791, %v790, -inf
        %793 = vmax.xlane.f32.xlu0 %v792
        %v794 = vpop.xlane.xlu0 %793
        %v795 = vsub.f32 %v790, %v794
        %v796 = vmul.f32 %v795, 1.442695
        %v797 = vpow.pop %v796
        %v798 = vsel %vm791, %v797, 0.0
        %799 = vadd.xlane.f32.xlu0 %v798
        %v800 = vpop.xlane.xlu0 %799
        %v801 = vrcp.pop %v800
        %v802 = vmul.f32 %v797, %v801
        %v804 = vsel %vm791, %v802, 0
        %806 = vmatprep.subr.mxu0 0.0
        %807 = vmatpush1.msra.mxu0 0.0
        %808 = vmatprep.subr.mxu0 0.0
        %809 = vmatpush1.msra.mxu0 0.0
        %810 = vmatprep.subr.mxu0 0.0
        %811 = vmatpush1.msra.mxu0 0.0
        %812 = vmatprep.subr.mxu0 0.0
        %813 = vmatpush1.msra.mxu0 0.0
        %814 = vmatprep.subr.mxu0 0.0
        %815 = vmatpush1.msra.mxu0 0.0
        %816 = vmatprep.subr.mxu0 0.0
        %817 = vmatpush1.msra.mxu0 0.0
        %818 = vmatprep.subr.mxu0 0.0
        %819 = vmatpush1.msra.mxu0 0.0
        %820 = vmatprep.subr.mxu0 0.0
        %821 = vmatpush1.msra.mxu0 0.0
        %822 = vmatprep.subr.mxu0 0.0
        %823 = vmatpush1.msra.mxu0 0.0
        %824 = vmatprep.subr.mxu0 0.0
        %825 = vmatpush1.msra.mxu0 0.0
        %826 = vmatprep.subr.mxu0 0.0
        %827 = vmatpush1.msra.mxu0 0.0
        %828 = vmatprep.subr.mxu0 0.0
        %829 = vmatpush1.msra.mxu0 0.0
        %830 = vmatprep.subr.mxu0 0.0
        %831 = vmatpush1.msra.mxu0 0.0
        %832 = vmatprep.subr.mxu0 0.0
        %833 = vmatpush1.msra.mxu0 0.0
        %834 = vmatprep.subr.mxu0 0.0
        %835 = vmatpush1.msra.mxu0 0.0
        %836 = vmatprep.subr.mxu0 0.0
        %837 = vmatpush1.msra.mxu0 %v708
        %838 = vmatprep.subr.mxu0 0.0
        %839 = vmatpush2.msra.mxu0 0.0
        %840 = vmatprep.subr.mxu0 0.0
        %841 = vmatpush2.msra.mxu0 0.0
        %842 = vmatprep.subr.mxu0 0.0
        %843 = vmatpush2.msra.mxu0 0.0
        %844 = vmatprep.subr.mxu0 0.0
        %845 = vmatpush2.msra.mxu0 0.0
        %846 = vmatprep.subr.mxu0 0.0
        %847 = vmatpush2.msra.mxu0 0.0
        %848 = vmatprep.subr.mxu0 0.0
        %849 = vmatpush2.msra.mxu0 0.0
        %850 = vmatprep.subr.mxu0 0.0
        %851 = vmatpush2.msra.mxu0 0.0
        %852 = vmatprep.subr.mxu0 0.0
        %853 = vmatpush2.msra.mxu0 0.0
        %854 = vmatprep.subr.mxu0 0.0
        %855 = vmatpush2.msra.mxu0 0.0
        %856 = vmatprep.subr.mxu0 0.0
        %857 = vmatpush2.msra.mxu0 0.0
        %858 = vmatprep.subr.mxu0 0.0
        %859 = vmatpush2.msra.mxu0 0.0
        %860 = vmatprep.subr.mxu0 0.0
        %861 = vmatpush2.msra.mxu0 0.0
        %862 = vmatprep.subr.mxu0 0.0
        %863 = vmatpush2.msra.mxu0 0.0
        %864 = vmatprep.subr.mxu0 0.0
        %865 = vmatpush2.msra.mxu0 0.0
        %866 = vmatprep.subr.mxu0 0.0
        %867 = vmatpush2.msra.mxu0 0.0
        %868 = vmatprep.subr.mxu0 0.0
        %869 = vmatpush2.msra.mxu0 0.0
        %870 = vmatprep.mubr.f32.mxu0 0.0
        %871 = vmatmul.mubr.f32.gmra.mxu0 %v804
        %v872 = vpop.f32.mrf.mxu0
        %v873 = vadd.f32 0.0, %v872
        %v874 = vpop.f32.mrf.mxu0
        %875 = vdwg.mxu0
        %876 = vst.msk [vmem:[#allocation2] sm:$0xff] %vm711, %v873
        %877 = vrot.lane.b32.xlu0 %v536, 96
        %v878 = vpop.permute.xlu0 %877
        %879 = vrot.lane.b32.xlu0 %v622, 96
        %v880 = vpop.permute.xlu0 %879
        %v881 = vsel %vm711, %v878, 0
        %v883 = vsel %vm711, %v880, 0
        %885 = vmatprep.subr.mxu0 0.0
        %886 = vmatpush1.xpose.msra.mxu0 0.0
        %887 = vmatprep.subr.mxu0 0.0
        %888 = vmatpush1.xpose.msra.mxu0 0.0
        %889 = vmatprep.subr.mxu0 0.0
        %890 = vmatpush1.xpose.msra.mxu0 0.0
        %891 = vmatprep.subr.mxu0 0.0
        %892 = vmatpush1.xpose.msra.mxu0 0.0
        %893 = vmatprep.subr.mxu0 0.0
        %894 = vmatpush1.xpose.msra.mxu0 0.0
        %895 = vmatprep.subr.mxu0 0.0
        %896 = vmatpush1.xpose.msra.mxu0 0.0
        %897 = vmatprep.subr.mxu0 0.0
        %898 = vmatpush1.xpose.msra.mxu0 0.0
        %899 = vmatprep.subr.mxu0 0.0
        %900 = vmatpush1.xpose.msra.mxu0 0.0
        %901 = vmatprep.subr.mxu0 0.0
        %902 = vmatpush1.xpose.msra.mxu0 0.0
        %903 = vmatprep.subr.mxu0 0.0
        %904 = vmatpush1.xpose.msra.mxu0 0.0
        %905 = vmatprep.subr.mxu0 0.0
        %906 = vmatpush1.xpose.msra.mxu0 0.0
        %907 = vmatprep.subr.mxu0 0.0
        %908 = vmatpush1.xpose.msra.mxu0 0.0
        %909 = vmatprep.subr.mxu0 0.0
        %910 = vmatpush1.xpose.msra.mxu0 0.0
        %911 = vmatprep.subr.mxu0 0.0
        %912 = vmatpush1.xpose.msra.mxu0 0.0
        %913 = vmatprep.subr.mxu0 0.0
        %914 = vmatpush1.xpose.msra.mxu0 0.0
        %915 = vmatprep.subr.mxu0 0.0
        %916 = vmatpush1.xpose.msra.mxu0 %v883
        %917 = vmatprep.subr.mxu0 0.0
        %918 = vmatpush2.xpose.msra.mxu0 0.0
        %919 = vmatprep.subr.mxu0 0.0
        %920 = vmatpush2.xpose.msra.mxu0 0.0
        %921 = vmatprep.subr.mxu0 0.0
        %922 = vmatpush2.xpose.msra.mxu0 0.0
        %923 = vmatprep.subr.mxu0 0.0
        %924 = vmatpush2.xpose.msra.mxu0 0.0
        %925 = vmatprep.subr.mxu0 0.0
        %926 = vmatpush2.xpose.msra.mxu0 0.0
        %927 = vmatprep.subr.mxu0 0.0
        %928 = vmatpush2.xpose.msra.mxu0 0.0
        %929 = vmatprep.subr.mxu0 0.0
        %930 = vmatpush2.xpose.msra.mxu0 0.0
        %931 = vmatprep.subr.mxu0 0.0
        %932 = vmatpush2.xpose.msra.mxu0 0.0
        %933 = vmatprep.subr.mxu0 0.0
        %934 = vmatpush2.xpose.msra.mxu0 0.0
        %935 = vmatprep.subr.mxu0 0.0
        %936 = vmatpush2.xpose.msra.mxu0 0.0
        %937 = vmatprep.subr.mxu0 0.0
        %938 = vmatpush2.xpose.msra.mxu0 0.0
        %939 = vmatprep.subr.mxu0 0.0
        %940 = vmatpush2.xpose.msra.mxu0 0.0
        %941 = vmatprep.subr.mxu0 0.0
        %942 = vmatpush2.xpose.msra.mxu0 0.0
        %943 = vmatprep.subr.mxu0 0.0
        %944 = vmatpush2.xpose.msra.mxu0 0.0
        %945 = vmatprep.subr.mxu0 0.0
        %946 = vmatpush2.xpose.msra.mxu0 0.0
        %947 = vmatprep.subr.mxu0 0.0
        %948 = vmatpush2.xpose.msra.mxu0 0.0
        %949 = vmatprep.mubr.f32.mxu0 0.0
        %950 = vmatmul.mubr.f32.gmra.mxu0 %v881
        %v951 = vpop.f32.mrf.mxu0
        %v952 = vadd.f32 0.0, %v951
        %v953 = vpop.f32.mrf.mxu0
        %954 = vdwg.mxu0
        %v955 = vmul.f32 %v952, 0.17677669
        %v956 = vsel %vm789, -1e+09, %v955
        %v957 = vsel %vm791, %v956, -inf
        %958 = vmax.xlane.f32.xlu0 %v957
        %v959 = vpop.xlane.xlu0 %958
        %v960 = vsub.f32 %v956, %v959
        %v961 = vmul.f32 %v960, 1.442695
        %v962 = vpow.pop %v961
        %v963 = vsel %vm791, %v962, 0.0
        %964 = vadd.xlane.f32.xlu0 %v963
        %v965 = vpop.xlane.xlu0 %964
        %v966 = vrcp.pop %v965
        %v967 = vmul.f32 %v962, %v966
        %969 = vrot.lane.b32.xlu0 %v708, 96
        %v970 = vpop.permute.xlu0 %969
        %v973 = vsel %vm791, %v967, 0
        %975 = vmatprep.subr.mxu0 0.0
        %976 = vmatpush1.msra.mxu0 0.0
        %977 = vmatprep.subr.mxu0 0.0
        %978 = vmatpush1.msra.mxu0 0.0
        %979 = vmatprep.subr.mxu0 0.0
        %980 = vmatpush1.msra.mxu0 0.0
        %981 = vmatprep.subr.mxu0 0.0
        %982 = vmatpush1.msra.mxu0 0.0
        %983 = vmatprep.subr.mxu0 0.0
        %984 = vmatpush1.msra.mxu0 0.0
        %985 = vmatprep.subr.mxu0 0.0
        %986 = vmatpush1.msra.mxu0 0.0
        %987 = vmatprep.subr.mxu0 0.0
        %988 = vmatpush1.msra.mxu0 0.0
        %989 = vmatprep.subr.mxu0 0.0
        %990 = vmatpush1.msra.mxu0 0.0
        %991 = vmatprep.subr.mxu0 0.0
        %992 = vmatpush1.msra.mxu0 0.0
        %993 = vmatprep.subr.mxu0 0.0
        %994 = vmatpush1.msra.mxu0 0.0
        %995 = vmatprep.subr.mxu0 0.0
        %996 = vmatpush1.msra.mxu0 0.0
        %997 = vmatprep.subr.mxu0 0.0
        %998 = vmatpush1.msra.mxu0 0.0
        %999 = vmatprep.subr.mxu0 0.0
        %1000 = vmatpush1.msra.mxu0 0.0
        %1001 = vmatprep.subr.mxu0 0.0
        %1002 = vmatpush1.msra.mxu0 0.0
        %1003 = vmatprep.subr.mxu0 0.0
        %1004 = vmatpush1.msra.mxu0 0.0
        %1005 = vmatprep.subr.mxu0 0.0
        %1006 = vmatpush1.msra.mxu0 %v970
        %1007 = vmatprep.subr.mxu0 0.0
        %1008 = vmatpush2.msra.mxu0 0.0
        %1009 = vmatprep.subr.mxu0 0.0
        %1010 = vmatpush2.msra.mxu0 0.0
        %1011 = vmatprep.subr.mxu0 0.0
        %1012 = vmatpush2.msra.mxu0 0.0
        %1013 = vmatprep.subr.mxu0 0.0
        %1014 = vmatpush2.msra.mxu0 0.0
        %1015 = vmatprep.subr.mxu0 0.0
        %1016 = vmatpush2.msra.mxu0 0.0
        %1017 = vmatprep.subr.mxu0 0.0
        %1018 = vmatpush2.msra.mxu0 0.0
        %1019 = vmatprep.subr.mxu0 0.0
        %1020 = vmatpush2.msra.mxu0 0.0
        %1021 = vmatprep.subr.mxu0 0.0
        %1022 = vmatpush2.msra.mxu0 0.0
        %1023 = vmatprep.subr.mxu0 0.0
        %1024 = vmatpush2.msra.mxu0 0.0
        %1025 = vmatprep.subr.mxu0 0.0
        %1026 = vmatpush2.msra.mxu0 0.0
        %1027 = vmatprep.subr.mxu0 0.0
        %1028 = vmatpush2.msra.mxu0 0.0
        %1029 = vmatprep.subr.mxu0 0.0
        %1030 = vmatpush2.msra.mxu0 0.0
        %1031 = vmatprep.subr.mxu0 0.0
        %1032 = vmatpush2.msra.mxu0 0.0
        %1033 = vmatprep.subr.mxu0 0.0
        %1034 = vmatpush2.msra.mxu0 0.0
        %1035 = vmatprep.subr.mxu0 0.0
        %1036 = vmatpush2.msra.mxu0 0.0
        %1037 = vmatprep.subr.mxu0 0.0
        %1038 = vmatpush2.msra.mxu0 0.0
        %1039 = vmatprep.mubr.f32.mxu0 0.0
        %1040 = vmatmul.mubr.f32.gmra.mxu0 %v973
        %v1041 = vpop.f32.mrf.mxu0
        %v1042 = vadd.f32 0.0, %v1041
        %v1043 = vpop.f32.mrf.mxu0
        %1044 = vdwg.mxu0
        %1046 = vrot.lane.b32.xlu0 %v1042, 32
        %v1047 = vpop.permute.xlu0 %1046
        %vm1049 = vcmask 523520
        %1050 = vst.msk [vmem:[#allocation2] sm:$0xff] %vm1049, %v1047
        %1051 = vrot.lane.b32.xlu0 %v536, 64
        %v1052 = vpop.permute.xlu0 %1051
        %1053 = vrot.lane.b32.xlu0 %v622, 64
        %v1054 = vpop.permute.xlu0 %1053
        %v1055 = vsel %vm711, %v1052, 0
        %v1057 = vsel %vm711, %v1054, 0
        %1059 = vmatprep.subr.mxu0 0.0
        %1060 = vmatpush1.xpose.msra.mxu0 0.0
        %1061 = vmatprep.subr.mxu0 0.0
        %1062 = vmatpush1.xpose.msra.mxu0 0.0
        %1063 = vmatprep.subr.mxu0 0.0
        %1064 = vmatpush1.xpose.msra.mxu0 0.0
        %1065 = vmatprep.subr.mxu0 0.0
        %1066 = vmatpush1.xpose.msra.mxu0 0.0
        %1067 = vmatprep.subr.mxu0 0.0
        %1068 = vmatpush1.xpose.msra.mxu0 0.0
        %1069 = vmatprep.subr.mxu0 0.0
        %1070 = vmatpush1.xpose.msra.mxu0 0.0
        %1071 = vmatprep.subr.mxu0 0.0
        %1072 = vmatpush1.xpose.msra.mxu0 0.0
        %1073 = vmatprep.subr.mxu0 0.0
        %1074 = vmatpush1.xpose.msra.mxu0 0.0
        %1075 = vmatprep.subr.mxu0 0.0
        %1076 = vmatpush1.xpose.msra.mxu0 0.0
        %1077 = vmatprep.subr.mxu0 0.0
        %1078 = vmatpush1.xpose.msra.mxu0 0.0
        %1079 = vmatprep.subr.mxu0 0.0
        %1080 = vmatpush1.xpose.msra.mxu0 0.0
        %1081 = vmatprep.subr.mxu0 0.0
        %1082 = vmatpush1.xpose.msra.mxu0 0.0
        %1083 = vmatprep.subr.mxu0 0.0
        %1084 = vmatpush1.xpose.msra.mxu0 0.0
        %1085 = vmatprep.subr.mxu0 0.0
        %1086 = vmatpush1.xpose.msra.mxu0 0.0
        %1087 = vmatprep.subr.mxu0 0.0
        %1088 = vmatpush1.xpose.msra.mxu0 0.0
        %1089 = vmatprep.subr.mxu0 0.0
        %1090 = vmatpush1.xpose.msra.mxu0 %v1057
        %1091 = vmatprep.subr.mxu0 0.0
        %1092 = vmatpush2.xpose.msra.mxu0 0.0
        %1093 = vmatprep.subr.mxu0 0.0
        %1094 = vmatpush2.xpose.msra.mxu0 0.0
        %1095 = vmatprep.subr.mxu0 0.0
        %1096 = vmatpush2.xpose.msra.mxu0 0.0
        %1097 = vmatprep.subr.mxu0 0.0
        %1098 = vmatpush2.xpose.msra.mxu0 0.0
        %1099 = vmatprep.subr.mxu0 0.0
        %1100 = vmatpush2.xpose.msra.mxu0 0.0
        %1101 = vmatprep.subr.mxu0 0.0
        %1102 = vmatpush2.xpose.msra.mxu0 0.0
        %1103 = vmatprep.subr.mxu0 0.0
        %1104 = vmatpush2.xpose.msra.mxu0 0.0
        %1105 = vmatprep.subr.mxu0 0.0
        %1106 = vmatpush2.xpose.msra.mxu0 0.0
        %1107 = vmatprep.subr.mxu0 0.0
        %1108 = vmatpush2.xpose.msra.mxu0 0.0
        %1109 = vmatprep.subr.mxu0 0.0
        %1110 = vmatpush2.xpose.msra.mxu0 0.0
        %1111 = vmatprep.subr.mxu0 0.0
        %1112 = vmatpush2.xpose.msra.mxu0 0.0
        %1113 = vmatprep.subr.mxu0 0.0
        %1114 = vmatpush2.xpose.msra.mxu0 0.0
        %1115 = vmatprep.subr.mxu0 0.0
        %1116 = vmatpush2.xpose.msra.mxu0 0.0
        %1117 = vmatprep.subr.mxu0 0.0
        %1118 = vmatpush2.xpose.msra.mxu0 0.0
        %1119 = vmatprep.subr.mxu0 0.0
        %1120 = vmatpush2.xpose.msra.mxu0 0.0
        %1121 = vmatprep.subr.mxu0 0.0
        %1122 = vmatpush2.xpose.msra.mxu0 0.0
        %1123 = vmatprep.mubr.f32.mxu0 0.0
        %1124 = vmatmul.mubr.f32.gmra.mxu0 %v1055
        %v1125 = vpop.f32.mrf.mxu0
        %v1126 = vadd.f32 0.0, %v1125
        %v1127 = vpop.f32.mrf.mxu0
        %1128 = vdwg.mxu0
        %v1129 = vmul.f32 %v1126, 0.17677669
        %v1130 = vsel %vm789, -1e+09, %v1129
        %v1131 = vsel %vm791, %v1130, -inf
        %1132 = vmax.xlane.f32.xlu0 %v1131
        %v1133 = vpop.xlane.xlu0 %1132
        %v1134 = vsub.f32 %v1130, %v1133
        %v1135 = vmul.f32 %v1134, 1.442695
        %v1136 = vpow.pop %v1135
        %v1137 = vsel %vm791, %v1136, 0.0
        %1138 = vadd.xlane.f32.xlu0 %v1137
        %v1139 = vpop.xlane.xlu0 %1138
        %v1140 = vrcp.pop %v1139
        %v1141 = vmul.f32 %v1136, %v1140
        %1142 = vrot.lane.b32.xlu0 %v708, 64
        %v1143 = vpop.permute.xlu0 %1142
        %v1146 = vsel %vm791, %v1141, 0
        %1148 = vmatprep.subr.mxu0 0.0
        %1149 = vmatpush1.msra.mxu0 0.0
        %1150 = vmatprep.subr.mxu0 0.0
        %1151 = vmatpush1.msra.mxu0 0.0
        %1152 = vmatprep.subr.mxu0 0.0
        %1153 = vmatpush1.msra.mxu0 0.0
        %1154 = vmatprep.subr.mxu0 0.0
        %1155 = vmatpush1.msra.mxu0 0.0
        %1156 = vmatprep.subr.mxu0 0.0
        %1157 = vmatpush1.msra.mxu0 0.0
        %1158 = vmatprep.subr.mxu0 0.0
        %1159 = vmatpush1.msra.mxu0 0.0
        %1160 = vmatprep.subr.mxu0 0.0
        %1161 = vmatpush1.msra.mxu0 0.0
        %1162 = vmatprep.subr.mxu0 0.0
        %1163 = vmatpush1.msra.mxu0 0.0
        %1164 = vmatprep.subr.mxu0 0.0
        %1165 = vmatpush1.msra.mxu0 0.0
        %1166 = vmatprep.subr.mxu0 0.0
        %1167 = vmatpush1.msra.mxu0 0.0
        %1168 = vmatprep.subr.mxu0 0.0
        %1169 = vmatpush1.msra.mxu0 0.0
        %1170 = vmatprep.subr.mxu0 0.0
        %1171 = vmatpush1.msra.mxu0 0.0
        %1172 = vmatprep.subr.mxu0 0.0
        %1173 = vmatpush1.msra.mxu0 0.0
        %1174 = vmatprep.subr.mxu0 0.0
        %1175 = vmatpush1.msra.mxu0 0.0
        %1176 = vmatprep.subr.mxu0 0.0
        %1177 = vmatpush1.msra.mxu0 0.0
        %1178 = vmatprep.subr.mxu0 0.0
        %1179 = vmatpush1.msra.mxu0 %v1143
        %1180 = vmatprep.subr.mxu0 0.0
        %1181 = vmatpush2.msra.mxu0 0.0
        %1182 = vmatprep.subr.mxu0 0.0
        %1183 = vmatpush2.msra.mxu0 0.0
        %1184 = vmatprep.subr.mxu0 0.0
        %1185 = vmatpush2.msra.mxu0 0.0
        %1186 = vmatprep.subr.mxu0 0.0
        %1187 = vmatpush2.msra.mxu0 0.0
        %1188 = vmatprep.subr.mxu0 0.0
        %1189 = vmatpush2.msra.mxu0 0.0
        %1190 = vmatprep.subr.mxu0 0.0
        %1191 = vmatpush2.msra.mxu0 0.0
        %1192 = vmatprep.subr.mxu0 0.0
        %1193 = vmatpush2.msra.mxu0 0.0
        %1194 = vmatprep.subr.mxu0 0.0
        %1195 = vmatpush2.msra.mxu0 0.0
        %1196 = vmatprep.subr.mxu0 0.0
        %1197 = vmatpush2.msra.mxu0 0.0
        %1198 = vmatprep.subr.mxu0 0.0
        %1199 = vmatpush2.msra.mxu0 0.0
        %1200 = vmatprep.subr.mxu0 0.0
        %1201 = vmatpush2.msra.mxu0 0.0
        %1202 = vmatprep.subr.mxu0 0.0
        %1203 = vmatpush2.msra.mxu0 0.0
        %1204 = vmatprep.subr.mxu0 0.0
        %1205 = vmatpush2.msra.mxu0 0.0
        %1206 = vmatprep.subr.mxu0 0.0
        %1207 = vmatpush2.msra.mxu0 0.0
        %1208 = vmatprep.subr.mxu0 0.0
        %1209 = vmatpush2.msra.mxu0 0.0
        %1210 = vmatprep.subr.mxu0 0.0
        %1211 = vmatpush2.msra.mxu0 0.0
        %1212 = vmatprep.mubr.f32.mxu0 0.0
        %1213 = vmatmul.mubr.f32.gmra.mxu0 %v1146
        %v1214 = vpop.f32.mrf.mxu0
        %v1215 = vadd.f32 0.0, %v1214
        %v1216 = vpop.f32.mrf.mxu0
        %1217 = vdwg.mxu0
        %1219 = vrot.lane.b32.xlu0 %v1215, 64
        %v1220 = vpop.permute.xlu0 %1219
        %vm1222 = vcmask 785920
        %1223 = vst.msk [vmem:[#allocation2] sm:$0xff] %vm1222, %v1220
        %1224 = vrot.lane.b32.xlu0 %v536, 32
        %v1225 = vpop.permute.xlu0 %1224
        %1226 = vrot.lane.b32.xlu0 %v622, 32
        %v1227 = vpop.permute.xlu0 %1226
        %v1228 = vsel %vm711, %v1225, 0
        %v1230 = vsel %vm711, %v1227, 0
        %1232 = vmatprep.subr.mxu0 0.0
        %1233 = vmatpush1.xpose.msra.mxu0 0.0
        %1234 = vmatprep.subr.mxu0 0.0
        %1235 = vmatpush1.xpose.msra.mxu0 0.0
        %1236 = vmatprep.subr.mxu0 0.0
        %1237 = vmatpush1.xpose.msra.mxu0 0.0
        %1238 = vmatprep.subr.mxu0 0.0
        %1239 = vmatpush1.xpose.msra.mxu0 0.0
        %1240 = vmatprep.subr.mxu0 0.0
        %1241 = vmatpush1.xpose.msra.mxu0 0.0
        %1242 = vmatprep.subr.mxu0 0.0
        %1243 = vmatpush1.xpose.msra.mxu0 0.0
        %1244 = vmatprep.subr.mxu0 0.0
        %1245 = vmatpush1.xpose.msra.mxu0 0.0
        %1246 = vmatprep.subr.mxu0 0.0
        %1247 = vmatpush1.xpose.msra.mxu0 0.0
        %1248 = vmatprep.subr.mxu0 0.0
        %1249 = vmatpush1.xpose.msra.mxu0 0.0
        %1250 = vmatprep.subr.mxu0 0.0
        %1251 = vmatpush1.xpose.msra.mxu0 0.0
        %1252 = vmatprep.subr.mxu0 0.0
        %1253 = vmatpush1.xpose.msra.mxu0 0.0
        %1254 = vmatprep.subr.mxu0 0.0
        %1255 = vmatpush1.xpose.msra.mxu0 0.0
        %1256 = vmatprep.subr.mxu0 0.0
        %1257 = vmatpush1.xpose.msra.mxu0 0.0
        %1258 = vmatprep.subr.mxu0 0.0
        %1259 = vmatpush1.xpose.msra.mxu0 0.0
        %1260 = vmatprep.subr.mxu0 0.0
        %1261 = vmatpush1.xpose.msra.mxu0 0.0
        %1262 = vmatprep.subr.mxu0 0.0
        %1263 = vmatpush1.xpose.msra.mxu0 %v1230
        %1264 = vmatprep.subr.mxu0 0.0
        %1265 = vmatpush2.xpose.msra.mxu0 0.0
        %1266 = vmatprep.subr.mxu0 0.0
        %1267 = vmatpush2.xpose.msra.mxu0 0.0
        %1268 = vmatprep.subr.mxu0 0.0
        %1269 = vmatpush2.xpose.msra.mxu0 0.0
        %1270 = vmatprep.subr.mxu0 0.0
        %1271 = vmatpush2.xpose.msra.mxu0 0.0
        %1272 = vmatprep.subr.mxu0 0.0
        %1273 = vmatpush2.xpose.msra.mxu0 0.0
        %1274 = vmatprep.subr.mxu0 0.0
        %1275 = vmatpush2.xpose.msra.mxu0 0.0
        %1276 = vmatprep.subr.mxu0 0.0
        %1277 = vmatpush2.xpose.msra.mxu0 0.0
        %1278 = vmatprep.subr.mxu0 0.0
        %1279 = vmatpush2.xpose.msra.mxu0 0.0
        %1280 = vmatprep.subr.mxu0 0.0
        %1281 = vmatpush2.xpose.msra.mxu0 0.0
        %1282 = vmatprep.subr.mxu0 0.0
        %1283 = vmatpush2.xpose.msra.mxu0 0.0
        %1284 = vmatprep.subr.mxu0 0.0
        %1285 = vmatpush2.xpose.msra.mxu0 0.0
        %1286 = vmatprep.subr.mxu0 0.0
        %1287 = vmatpush2.xpose.msra.mxu0 0.0
        %1288 = vmatprep.subr.mxu0 0.0
        %1289 = vmatpush2.xpose.msra.mxu0 0.0
        %1290 = vmatprep.subr.mxu0 0.0
        %1291 = vmatpush2.xpose.msra.mxu0 0.0
        %1292 = vmatprep.subr.mxu0 0.0
        %1293 = vmatpush2.xpose.msra.mxu0 0.0
        %1294 = vmatprep.subr.mxu0 0.0
        %1295 = vmatpush2.xpose.msra.mxu0 0.0
        %1296 = vmatprep.mubr.f32.mxu0 0.0
        %1297 = vmatmul.mubr.f32.gmra.mxu0 %v1228
        %v1298 = vpop.f32.mrf.mxu0
        %v1299 = vadd.f32 0.0, %v1298
        %v1300 = vpop.f32.mrf.mxu0
        %1301 = vdwg.mxu0
        %v1302 = vmul.f32 %v1299, 0.17677669
        %v1303 = vsel %vm789, -1e+09, %v1302
        %v1304 = vsel %vm791, %v1303, -inf
        %1305 = vmax.xlane.f32.xlu0 %v1304
        %v1306 = vpop.xlane.xlu0 %1305
        %v1307 = vsub.f32 %v1303, %v1306
        %v1308 = vmul.f32 %v1307, 1.442695
        %v1309 = vpow.pop %v1308
        %v1310 = vsel %vm791, %v1309, 0.0
        %1311 = vadd.xlane.f32.xlu0 %v1310
        %v1312 = vpop.xlane.xlu0 %1311
        %v1313 = vrcp.pop %v1312
        %v1314 = vmul.f32 %v1309, %v1313
        %1315 = vrot.lane.b32.xlu0 %v708, 32
        %v1316 = vpop.permute.xlu0 %1315
        %v1319 = vsel %vm791, %v1314, 0
        %1321 = vmatprep.subr.mxu0 0.0
        %1322 = vmatpush1.msra.mxu0 0.0
        %1323 = vmatprep.subr.mxu0 0.0
        %1324 = vmatpush1.msra.mxu0 0.0
        %1325 = vmatprep.subr.mxu0 0.0
        %1326 = vmatpush1.msra.mxu0 0.0
        %1327 = vmatprep.subr.mxu0 0.0
        %1328 = vmatpush1.msra.mxu0 0.0
        %1329 = vmatprep.subr.mxu0 0.0
        %1330 = vmatpush1.msra.mxu0 0.0
        %1331 = vmatprep.subr.mxu0 0.0
        %1332 = vmatpush1.msra.mxu0 0.0
        %1333 = vmatprep.subr.mxu0 0.0
        %1334 = vmatpush1.msra.mxu0 0.0
        %1335 = vmatprep.subr.mxu0 0.0
        %1336 = vmatpush1.msra.mxu0 0.0
        %1337 = vmatprep.subr.mxu0 0.0
        %1338 = vmatpush1.msra.mxu0 0.0
        %1339 = vmatprep.subr.mxu0 0.0
        %1340 = vmatpush1.msra.mxu0 0.0
        %1341 = vmatprep.subr.mxu0 0.0
        %1342 = vmatpush1.msra.mxu0 0.0
        %1343 = vmatprep.subr.mxu0 0.0
        %1344 = vmatpush1.msra.mxu0 0.0
        %1345 = vmatprep.subr.mxu0 0.0
        %1346 = vmatpush1.msra.mxu0 0.0
        %1347 = vmatprep.subr.mxu0 0.0
        %1348 = vmatpush1.msra.mxu0 0.0
        %1349 = vmatprep.subr.mxu0 0.0
        %1350 = vmatpush1.msra.mxu0 0.0
        %1351 = vmatprep.subr.mxu0 0.0
        %1352 = vmatpush1.msra.mxu0 %v1316
        %1353 = vmatprep.subr.mxu0 0.0
        %1354 = vmatpush2.msra.mxu0 0.0
        %1355 = vmatprep.subr.mxu0 0.0
        %1356 = vmatpush2.msra.mxu0 0.0
        %1357 = vmatprep.subr.mxu0 0.0
        %1358 = vmatpush2.msra.mxu0 0.0
        %1359 = vmatprep.subr.mxu0 0.0
        %1360 = vmatpush2.msra.mxu0 0.0
        %1361 = vmatprep.subr.mxu0 0.0
        %1362 = vmatpush2.msra.mxu0 0.0
        %1363 = vmatprep.subr.mxu0 0.0
        %1364 = vmatpush2.msra.mxu0 0.0
        %1365 = vmatprep.subr.mxu0 0.0
        %1366 = vmatpush2.msra.mxu0 0.0
        %1367 = vmatprep.subr.mxu0 0.0
        %1368 = vmatpush2.msra.mxu0 0.0
        %1369 = vmatprep.subr.mxu0 0.0
        %1370 = vmatpush2.msra.mxu0 0.0
        %1371 = vmatprep.subr.mxu0 0.0
        %1372 = vmatpush2.msra.mxu0 0.0
        %1373 = vmatprep.subr.mxu0 0.0
        %1374 = vmatpush2.msra.mxu0 0.0
        %1375 = vmatprep.subr.mxu0 0.0
        %1376 = vmatpush2.msra.mxu0 0.0
        %1377 = vmatprep.subr.mxu0 0.0
        %1378 = vmatpush2.msra.mxu0 0.0
        %1379 = vmatprep.subr.mxu0 0.0
        %1380 = vmatpush2.msra.mxu0 0.0
        %1381 = vmatprep.subr.mxu0 0.0
        %1382 = vmatpush2.msra.mxu0 0.0
        %1383 = vmatprep.subr.mxu0 0.0
        %1384 = vmatpush2.msra.mxu0 0.0
        %1385 = vmatprep.mubr.f32.mxu0 0.0
        %1386 = vmatmul.mubr.f32.gmra.mxu0 %v1319
        %v1387 = vpop.f32.mrf.mxu0
        %v1388 = vadd.f32 0.0, %v1387
        %v1389 = vpop.f32.mrf.mxu0
        %1390 = vdwg.mxu0
        %1392 = vrot.lane.b32.xlu0 %v1388, 96
        %v1393 = vpop.permute.xlu0 %1392
        %vm1395 = vcmask 1048320
        %1396 = vst.msk [vmem:[#allocation2] sm:$0xff] %vm1395, %v1393
        %v1397 = vld [vmem:[#allocation2] sm:$0xff]
        %v1398 = vld [vmem:[#allocation14] sm:$0xff]
        %v1399 = vld [vmem:[#allocation14 + $0x8] sm:$0xff]
        %v1400 = vld [vmem:[#allocation14 + $0x10] sm:$0xff]
        %v1401 = vld [vmem:[#allocation14 + $0x18] sm:$0xff]
        %v1402 = vld [vmem:[#allocation14 + $0x20] sm:$0xff]
        %v1403 = vld [vmem:[#allocation14 + $0x28] sm:$0xff]
        %v1404 = vld [vmem:[#allocation14 + $0x30] sm:$0xff]
        %v1405 = vld [vmem:[#allocation14 + $0x38] sm:$0xff]
        %v1406 = vld [vmem:[#allocation14 + $0x40] sm:$0xff]
        %v1407 = vld [vmem:[#allocation14 + $0x48] sm:$0xff]
        %v1408 = vld [vmem:[#allocation14 + $0x50] sm:$0xff]
        %v1409 = vld [vmem:[#allocation14 + $0x58] sm:$0xff]
        %v1410 = vld [vmem:[#allocation14 + $0x60] sm:$0xff]
        %v1411 = vld [vmem:[#allocation14 + $0x68] sm:$0xff]
        %v1412 = vld [vmem:[#allocation14 + $0x70] sm:$0xff]
        %v1413 = vld [vmem:[#allocation14 + $0x78] sm:$0xff]
        %1414 = vmatprep.subr.mxu0 0.0
        %1415 = vmatpush1.msra.mxu0 %v1413
        %1416 = vmatprep.subr.mxu0 0.0
        %1417 = vmatpush1.msra.mxu0 %v1412
        %1418 = vmatprep.subr.mxu0 0.0
        %1419 = vmatpush1.msra.mxu0 %v1411
        %1420 = vmatprep.subr.mxu0 0.0
        %1421 = vmatpush1.msra.mxu0 %v1410
        %1422 = vmatprep.subr.mxu0 0.0
        %1423 = vmatpush1.msra.mxu0 %v1409
        %1424 = vmatprep.subr.mxu0 0.0
        %1425 = vmatpush1.msra.mxu0 %v1408
        %1426 = vmatprep.subr.mxu0 0.0
        %1427 = vmatpush1.msra.mxu0 %v1407
        %1428 = vmatprep.subr.mxu0 0.0
        %1429 = vmatpush1.msra.mxu0 %v1406
        %1430 = vmatprep.subr.mxu0 0.0
        %1431 = vmatpush1.msra.mxu0 %v1405
        %1432 = vmatprep.subr.mxu0 0.0
        %1433 = vmatpush1.msra.mxu0 %v1404
        %1434 = vmatprep.subr.mxu0 0.0
        %1435 = vmatpush1.msra.mxu0 %v1403
        %1436 = vmatprep.subr.mxu0 0.0
        %1437 = vmatpush1.msra.mxu0 %v1402
        %1438 = vmatprep.subr.mxu0 0.0
        %1439 = vmatpush1.msra.mxu0 %v1401
        %1440 = vmatprep.subr.mxu0 0.0
        %1441 = vmatpush1.msra.mxu0 %v1400
        %1442 = vmatprep.subr.mxu0 0.0
        %1443 = vmatpush1.msra.mxu0 %v1399
        %1444 = vmatprep.subr.mxu0 0.0
        %1445 = vmatpush1.msra.mxu0 %v1398
        %1446 = vmatprep.subr.mxu0 0.0
        %1447 = vmatpush2.msra.mxu0 0.0
        %1448 = vmatprep.subr.mxu0 0.0
        %1449 = vmatpush2.msra.mxu0 0.0
        %1450 = vmatprep.subr.mxu0 0.0
        %1451 = vmatpush2.msra.mxu0 0.0
        %1452 = vmatprep.subr.mxu0 0.0
        %1453 = vmatpush2.msra.mxu0 0.0
        %1454 = vmatprep.subr.mxu0 0.0
        %1455 = vmatpush2.msra.mxu0 0.0
        %1456 = vmatprep.subr.mxu0 0.0
        %1457 = vmatpush2.msra.mxu0 0.0
        %1458 = vmatprep.subr.mxu0 0.0
        %1459 = vmatpush2.msra.mxu0 0.0
        %1460 = vmatprep.subr.mxu0 0.0
        %1461 = vmatpush2.msra.mxu0 0.0
        %1462 = vmatprep.subr.mxu0 0.0
        %1463 = vmatpush2.msra.mxu0 0.0
        %1464 = vmatprep.subr.mxu0 0.0
        %1465 = vmatpush2.msra.mxu0 0.0
        %1466 = vmatprep.subr.mxu0 0.0
        %1467 = vmatpush2.msra.mxu0 0.0
        %1468 = vmatprep.subr.mxu0 0.0
        %1469 = vmatpush2.msra.mxu0 0.0
        %1470 = vmatprep.subr.mxu0 0.0
        %1471 = vmatpush2.msra.mxu0 0.0
        %1472 = vmatprep.subr.mxu0 0.0
        %1473 = vmatpush2.msra.mxu0 0.0
        %1474 = vmatprep.subr.mxu0 0.0
        %1475 = vmatpush2.msra.mxu0 0.0
        %1476 = vmatprep.subr.mxu0 0.0
        %1477 = vmatpush2.msra.mxu0 0.0
        %1478 = vmatprep.mubr.f32.mxu0 0.0
        %1479 = vmatmul.mubr.f32.gmra.mxu0 %v1397
        %v1480 = vpop.f32.mrf.mxu0
        %v1481 = vadd.f32 %v450, %v1480
        %v1482 = vpop.f32.mrf.mxu0
        %1483 = vdwg.mxu0
        %v1484 = vld [vmem:[%s7] sm:$0x1]
        %v1485 = vld [vmem:[%s7 + $0x1] sm:$0x1]
        %1486 = vadd.xlane.f32.xlu0 %v1481
        %v1487 = vpop.xlane.xlu0 %1486
        %v1488 = vrcp.pop 128.0
        %v1489 = vmul.f32 %v1487, %v1488
        %v1490 = vsub.f32 %v1481, %v1489
        %v1491 = vmul.f32 %v1490, %v1490
        %1492 = vadd.xlane.f32.xlu0 %v1491
        %v1493 = vpop.xlane.xlu0 %1492
        %v1494 = vmul.f32 %v1493, %v1488
        %v1495 = vadd.f32 %v1494, 1e-05
        %v1496 = vrsqrt.pop %v1495
        %v1497 = vmul.f32 %v1490, %v1496
        %v1498 = vlaneseq
        %v1499 = vshrl.u32 %v1498, 7
        %v1500 = vsub.s32 0, %v1499
        %v1501 = vrot.slane %v1484, %v1500
        %v1502 = vmul.f32 %v1497, %v1501
        %v1503 = vlaneseq
        %v1504 = vshrl.u32 %v1503, 7
        %v1505 = vsub.s32 0, %v1504
        %v1506 = vrot.slane %v1485, %v1505
        %v1507 = vadd.f32 %v1502, %v1506
        %1508 = vst [vmem:[%s449] sm:$0xff] %v1507
        %s1509 = sand.u32 %s221, 1
        %s1510 = scalar_lea.sflag [#allocation5], %s1509
        %s1511 = sand.u32 %s221, 1
        %s1512 = smul.addr %s1511, 8
        %s1513 = scalar_lea.vmem [#allocation15], %s1512
        // Predicated region
        $region81: #{tpu_custom_call.1} parent=51 // pred_check
          %p1514 = pneg %p231
        $region82: #{tpu_custom_call.1} parent=51 // pred_check_branch
          %1516 = sbr.rel (%p1514) target = $region84
        $region83: #{tpu_custom_call.1} parent=51 // pred_region
          %s1518 = ssub.s32 128, 128
          %1519 = vsyncadd %s1510, %s1518
          %s1520 = smul.addr %s30, 128
          %s1521 = scalar_lea.hbm %s8, %s1520
          %s1523 = sshll.u32 %s1513, 4
          %s1524 = int_to_ptr.vmem [resolvable:$true] %s1523
          %1526 = dma.vmem_to_hbm [thread:$0]  %s1524, 128, %s1521, %s1510
        $region84: #{tpu_custom_call.1} parent=51 // pred_fallthru
          _
      $region52: #{tpu_custom_call.1} parent=5 // pred_fallthru
        _
      %p1527 = scmp.le.s32.totalorder 2, %s25
      // Predicated region
      $region85: #{tpu_custom_call.1} parent=5 // pred_check
        %p1528 = pneg %p1527
      $region86: #{tpu_custom_call.1} parent=5 // pred_check_branch
        %1530 = sbr.rel (%p1528) target = $region88
      $region87: #{tpu_custom_call.1} parent=5 // pred_region
        %s1531 = ssub.s32 %s25, 2
        // Predicated region
        $region89: #{tpu_custom_call.1} parent=87 // pred_check
          %p1532 = pneg %p237
        $region90: #{tpu_custom_call.1} parent=87 // pred_check_branch
          %1534 = sbr.rel (%p1532) target = $region92
        $region91: #{tpu_custom_call.1} parent=87 // pred_region
          %s1535 = sand.u32 %s222, 1
          %s1536 = scalar_lea.sflag [#allocation5], %s1535
          %s1537 = sand.u32 %s222, 1
          %s1538 = smul.addr %s1537, 8
          %s1539 = scalar_lea.vmem [#allocation15], %s1538
          %1540 = dma.done %s1536, 128
        $region92: #{tpu_custom_call.1} parent=87 // pred_fallthru
          _
      $region88: #{tpu_custom_call.1} parent=5 // pred_fallthru
        _
    $region6: #{tpu_custom_call.1} parent=1 // loop_footer
      %s29 = sadd.s32 1, %s25
    $region7: #{tpu_custom_call.1} parent=1 // loop_footer_branch
      %24 = sbr.rel target = $region3
    $region8: #{tpu_custom_call.1} parent=1 // loop_exit
      _
    %1541 = vsyncpa [#allocation4], 1
    %s1542 = scalar_lea.sflag [#allocation4], 1
    %1543 = vsyncpa %s1542, 1
    %1544 = vsyncpa [#allocation7], 1
    %s1545 = scalar_lea.sflag [#allocation7], 1
    %1546 = vsyncpa %s1545, 1
    %1547 = vsyncpa [#allocation10], 1
    %1548 = vsyncpa [#allocation13], 1
    %1549 = vsyncpa [#allocation5], 1
    %s1550 = scalar_lea.sflag [#allocation5], 1
    %1551 = vsyncpa %s1550, 1

</llo_original>
